<compile_context>
chip_gen: v7x
topology: tpu7x:2x2x1
jax: 0.10.0
libtpu: 0.0.40
codegen_flags: <defaults>
</compile_context>

<pallas_src>
import jax
import jax.numpy as jnp
from jax.experimental import pallas as pl
from jax.experimental.pallas import tpu as pltpu


def _round_up(x, m):
    return ((x + m - 1) // m) * m


# -----------------------------------------------------------------------------
# Fused per-step kernel: attention + weighted encoder rep + GRU cell + out proj
# -----------------------------------------------------------------------------
def decoder_kernel(emb_ref, h_ref, enc_ref, ee_ref,
                   wa_h_ref, wi_ref, bih_ref, whh_ref, bhh_ref, wo_ref, bo_ref,
                   logits_ref, hnew_ref,
                   cat_rnn_ref, cat_out_ref):
    emb = emb_ref[...]                       # (Bp, Ep)      compute dtype
    cdt = emb.dtype
    h_f32 = h_ref[...]                       # (Bp, Hp)      f32 carried hidden
    h_c = h_f32.astype(cdt)
    enc = enc_ref[...]                       # (Bp, S, EH2p) compute dtype

    Ep = emb.shape[1]
    Hp = h_f32.shape[1]
    EH2p = enc.shape[2]

    # ---- attention: energy = tanh((enc @ Wa_e + ba)  [hoisted, step-invariant]  + h @ Wa_h) ----
    e_h = jnp.dot(h_c, wa_h_ref[...], preferred_element_type=jnp.float32)     # (Bp, Ap)
    energy = jnp.tanh(ee_ref[...] + e_h[:, None, :])                          # (Bp, S, Ap)
    scores = jnp.sum(energy, axis=2)                                          # (Bp, S)
    scores = scores - jnp.max(scores, axis=1, keepdims=True)                  # stable softmax over S
    ex = jnp.exp(scores)
    a = ex / jnp.sum(ex, axis=1, keepdims=True)                               # (Bp, S), f32

    # ---- weighted encoder rep: sum_s a[b,s] * enc[b,s,:] ----
    # S is tiny here; broadcast-mul + sublane reduce is cheap.  For large src_len
    # this should move to an MXU dot_general ('bs,bse->be').
    weighted_f32 = jnp.sum(a[:, :, None] * enc, axis=1)                       # (Bp, EH2p) f32
    weighted = weighted_f32.astype(cdt)

    # ---- GRU cell (PyTorch gate order r, z, n); fused K = Ep+EH2p input matmul ----
    cat_rnn_ref[:, :Ep] = emb
    cat_rnn_ref[:, Ep:] = weighted
    gi = jnp.dot(cat_rnn_ref[...], wi_ref[...],
                 preferred_element_type=jnp.float32) + bih_ref[...]           # (Bp, 3Hp)
    gh = jnp.dot(h_c, whh_ref[...],
                 preferred_element_type=jnp.float32) + bhh_ref[...]           # (Bp, 3Hp)
    r = jax.nn.sigmoid(gi[:, :Hp] + gh[:, :Hp])
    z = jax.nn.sigmoid(gi[:, Hp:2 * Hp] + gh[:, Hp:2 * Hp])
    n = jnp.tanh(gi[:, 2 * Hp:] + r * gh[:, 2 * Hp:])
    h_new = (1.0 - z) * n + z * h_f32                                         # (Bp, Hp), f32

    # ---- output projection on cat(h_new, weighted, embedded): single fused matmul ----
    cat_out_ref[:, :Hp] = h_new.astype(cdt)
    cat_out_ref[:, Hp:Hp + EH2p] = weighted
    cat_out_ref[:, Hp + EH2p:] = emb
    logits = jnp.dot(cat_out_ref[...], wo_ref[...],
                     preferred_element_type=jnp.float32) + bo_ref[...]        # (Bp, Vp)

    logits_ref[...] = logits
    hnew_ref[...] = h_new


# -----------------------------------------------------------------------------
# One-time parameter preparation: transpose / split / pad / fuse / cast weights
# -----------------------------------------------------------------------------
def prepare_params(params, compute_dtype=jnp.bfloat16):
    W_attn, b_attn = params['W_attn'], params['b_attn']
    W_ih, W_hh = params['W_ih'], params['W_hh']
    b_ih, b_hh = params['b_ih'], params['b_hh']
    W_out, b_out = params['W_out'], params['b_out']
    emb_table = params['emb_table']

    A = W_attn.shape[0]
    H = W_hh.shape[1]
    E = emb_table.shape[1]
    EH2 = W_ih.shape[1] - E
    V = W_out.shape[0]
    assert W_attn.shape[1] == H + EH2
    assert W_out.shape[1] == H + EH2 + E
    assert W_ih.shape[0] == 3 * H

    Ep, Hp, EH2p, Ap, Vp = (_round_up(d, 128) for d in (E, H, EH2, A, V))
    f32 = jnp.float32

    # attention weights, split hidden / encoder parts (eliminates the concat)
    WaT = W_attn.T.astype(f32)                                     # (H+2EH, A)
    wa_h = jnp.zeros((Hp, Ap), f32).at[:H, :A].set(WaT[:H])
    wa_e = jnp.zeros((EH2p, Ap), f32).at[:EH2, :A].set(WaT[H:])
    ba = jnp.zeros((Ap,), f32).at[:A].set(b_attn)

    # GRU weights: fused (emb | weighted) input weight; gates padded to Hp blocks (r, z, n)
    WihT = W_ih.T.astype(f32)                                      # (E+2EH, 3H)
    WhhT = W_hh.T.astype(f32)                                      # (H, 3H)
    wi = jnp.zeros((Ep + EH2p, 3 * Hp), f32)
    whh = jnp.zeros((Hp, 3 * Hp), f32)
    bih = jnp.zeros((3 * Hp,), f32)
    bhh = jnp.zeros((3 * Hp,), f32)
    for g in range(3):
        blk = WihT[:, g * H:(g + 1) * H]
        wi = wi.at[:E, g * Hp:g * Hp + H].set(blk[:E])
        wi = wi.at[Ep:Ep + EH2, g * Hp:g * Hp + H].set(blk[E:])
        whh = whh.at[:H, g * Hp:g * Hp + H].set(WhhT[:, g * H:(g + 1) * H])
        bih = bih.at[g * Hp:g * Hp + H].set(b_ih[g * H:(g + 1) * H])
        bhh = bhh.at[g * Hp:g * Hp + H].set(b_hh[g * H:(g + 1) * H])

    # output layer: fused (h_new | weighted | emb) weight
    WoT = W_out.T.astype(f32)                                      # (H+2EH+E, V)
    wo = jnp.zeros((Hp + EH2p + Ep, Vp), f32)
    wo = wo.at[:H, :V].set(WoT[:H])
    wo = wo.at[Hp:Hp + EH2, :V].set(WoT[H:H + EH2])
    wo = wo.at[Hp + EH2p:Hp + EH2p + E, :V].set(WoT[H + EH2:])
    bo = jnp.zeros((Vp,), f32).at[:V].set(b_out)

    emb_tab = jnp.zeros((emb_table.shape[0], Ep), f32).at[:, :E].set(emb_table)

    cdt = compute_dtype
    return {
        'dims': dict(E=E, H=H, EH2=EH2, A=A, V=V, Ep=Ep, Hp=Hp, EH2p=EH2p, Ap=Ap, Vp=Vp),
        'compute_dtype': cdt,
        'emb_table': emb_tab.astype(cdt),
        'wa_h': wa_h.astype(cdt),
        'wa_e': wa_e,                 # f32 — only used in the once-per-sequence projection
        'ba': ba,                     # f32 — folded into enc_energy at prepare_encoder time
        'wi': wi.astype(cdt), 'bih': bih[None, :],
        'whh': whh.astype(cdt), 'bhh': bhh[None, :],
        'wo': wo.astype(cdt), 'bo': bo[None, :],
    }


# -----------------------------------------------------------------------------
# Once per sequence: batch-major layout + hoisted encoder-side attention proj
# -----------------------------------------------------------------------------
def prepare_encoder(prep, encoder_outputs):
    d = prep['dims']
    S, B, EH2 = encoder_outputs.shape
    assert EH2 == d['EH2']
    Bp = _round_up(B, 8)

    enc_bm = jnp.transpose(encoder_outputs, (1, 0, 2)).astype(jnp.float32)   # (B, S, 2EH)
    enc_p = jnp.zeros((Bp, S, d['EH2p']), jnp.float32).at[:B, :, :EH2].set(enc_bm)
    # Step-invariant attention projection (+ bias), hoisted out of the per-token kernel.
    enc_energy = jnp.einsum('bse,ea->bsa', enc_p, prep['wa_e']) + prep['ba']  # (Bp, S, Ap) f32

    return {'enc': enc_p.astype(prep['compute_dtype']),
            'enc_energy': enc_energy,
            'B': B, 'Bp': Bp, 'S': S}


# -----------------------------------------------------------------------------
# Per-token decode step (== the module's forward): one fused pallas_call
# -----------------------------------------------------------------------------
def decoder_step(prep, enc_prep, input_ids, decoder_hidden):
    d = prep['dims']
    cdt = prep['compute_dtype']
    B = input_ids.shape[0]
    Bp = enc_prep['Bp']
    assert B == enc_prep['B']
    assert decoder_hidden.shape == (B, d['H'])

    # embedding lookup: tiny gather, done as JAX glue
    emb = jnp.take(prep['emb_table'], input_ids, axis=0)                      # (B, Ep)
    emb_p = jnp.zeros((Bp, d['Ep']), cdt).at[:B].set(emb)
    h_p = jnp.zeros((Bp, d['Hp']), jnp.float32).at[:B, :d['H']].set(
        decoder_hidden.astype(jnp.float32))

    vmem = pl.BlockSpec(memory_space=pltpu.MemorySpace.VMEM)
    logits_p, h_new_p = pl.pallas_call(
        decoder_kernel,
        out_shape=(jax.ShapeDtypeStruct((Bp, d['Vp']), jnp.float32),
                   jax.ShapeDtypeStruct((Bp, d['Hp']), jnp.float32)),
        in_specs=[vmem] * 11,
        out_specs=(vmem, vmem),
        scratch_shapes=[pltpu.VMEM((Bp, d['Ep'] + d['EH2p']), cdt),
                        pltpu.VMEM((Bp, d['Hp'] + d['EH2p'] + d['Ep']), cdt)],
    )(emb_p, h_p, enc_prep['enc'], enc_prep['enc_energy'],
      prep['wa_h'], prep['wi'], prep['bih'], prep['whh'], prep['bhh'],
      prep['wo'], prep['bo'])

    return logits_p[:B, :d['V']], h_new_p[:B, :d['H']]


# -----------------------------------------------------------------------------
# Pure-JAX reference (mirrors the PyTorch forward 1:1) for verification
# -----------------------------------------------------------------------------
def decoder_reference(params, input_ids, decoder_hidden, encoder_outputs):
    emb = params['emb_table'][input_ids]                          # (B, E)
    S = encoder_outputs.shape[0]
    h = decoder_hidden
    H = h.shape[1]

    h_rep = jnp.repeat(h[:, None, :], S, axis=1)                  # (B, S, H)
    enc_bm = jnp.transpose(encoder_outputs, (1, 0, 2))            # (B, S, 2EH)
    cat = jnp.concatenate([h_rep, enc_bm], axis=2)
    energy = jnp.tanh(cat @ params['W_attn'].T + params['b_attn'])
    a = jax.nn.softmax(jnp.sum(energy, axis=2), axis=1)           # (B, S)
    weighted = jnp.einsum('bs,bse->be', a, enc_bm)                # (B, 2EH)

    x = jnp.concatenate([emb, weighted], axis=1)
    gi = x @ params['W_ih'].T + params['b_ih']
    gh = h @ params['W_hh'].T + params['b_hh']
    r = jax.nn.sigmoid(gi[:, :H] + gh[:, :H])
    z = jax.nn.sigmoid(gi[:, H:2 * H] + gh[:, H:2 * H])
    n = jnp.tanh(gi[:, 2 * H:] + r * gh[:, 2 * H:])
    h_new = (1 - z) * n + z * h

    out_in = jnp.concatenate([h_new, weighted, emb], axis=1)
    logits = out_in @ params['W_out'].T + params['b_out']
    return logits, h_new


# -----------------------------------------------------------------------------
# Deterministic parameter init (shapes per the PyTorch module __init__)
# -----------------------------------------------------------------------------
def init_params(key, output_dim, emb_dim, enc_hid_dim, dec_hid_dim, attn_dim):
    attn_in = enc_hid_dim * 2 + dec_hid_dim
    rnn_in = enc_hid_dim * 2 + emb_dim
    out_in = attn_in + emb_dim

    def uni(k, shape, bound):
        return jax.random.uniform(k, shape, jnp.float32, -bound, bound)

    ks = jax.random.split(key, 10)
    kg = 1.0 / jnp.sqrt(dec_hid_dim)
    return {
        'emb_table': jax.random.normal(ks[0], (output_dim, emb_dim), jnp.float32),
        'W_attn': uni(ks[1], (attn_dim, attn_in), 1.0 / jnp.sqrt(attn_in)),
        'b_attn': uni(ks[2], (attn_dim,), 1.0 / jnp.sqrt(attn_in)),
        'W_ih': uni(ks[3], (3 * dec_hid_dim, rnn_in), kg),
        'W_hh': uni(ks[4], (3 * dec_hid_dim, dec_hid_dim), kg),
        'b_ih': uni(ks[5], (3 * dec_hid_dim,), kg),
        'b_hh': uni(ks[6], (3 * dec_hid_dim,), kg),
        'W_out': uni(ks[7], (output_dim, out_in), 1.0 / jnp.sqrt(out_in)),
        'b_out': uni(ks[8], (output_dim,), 1.0 / jnp.sqrt(out_in)),
    }


if __name__ == "__main__":
    # Small shapes consistent with the module's forward.
    OUTPUT_DIM = 64     # vocab
    EMB_DIM = 32
    ENC_HID = 32        # encoder outputs have feature dim 2 * ENC_HID = 64
    DEC_HID = 32
    ATTN_DIM = 16
    SRC_LEN = 8
    BATCH = 2

    key = jax.random.PRNGKey(0)
    kp, k1, k2, k3 = jax.random.split(key, 4)
    params = init_params(kp, OUTPUT_DIM, EMB_DIM, ENC_HID, DEC_HID, ATTN_DIM)

    input_ids = jax.random.randint(k1, (BATCH,), 0, OUTPUT_DIM)                    # (B,)
    decoder_hidden = jax.random.normal(k2, (BATCH, DEC_HID), jnp.float32)          # (B, H)
    encoder_outputs = jax.random.normal(k3, (SRC_LEN, BATCH, 2 * ENC_HID),
                                        jnp.float32)                               # (S, B, 2EH)

    ref_logits, ref_h = decoder_reference(params, input_ids, decoder_hidden, encoder_outputs)

    # --- f32 MXU path (exact check) ---
    prep32 = prepare_params(params, compute_dtype=jnp.float32)
    encp32 = prepare_encoder(prep32, encoder_outputs)
    logits, h_new = decoder_step(prep32, encp32, input_ids, decoder_hidden)
    logits, h_new = jax.block_until_ready((logits, h_new))
    assert logits.shape == (BATCH, OUTPUT_DIM) and h_new.shape == (BATCH, DEC_HID)
    assert jnp.allclose(logits, ref_logits, atol=2e-4, rtol=2e-4)
    assert jnp.allclose(h_new, ref_h, atol=2e-4, rtol=2e-4)

    # --- bf16 MXU path (preferred on v6e/v7x; f32 gate/softmax math) ---
    prep16 = prepare_params(params, compute_dtype=jnp.bfloat16)
    encp16 = prepare_encoder(prep16, encoder_outputs)
    logits16, h16 = jax.block_until_ready(
        decoder_step(prep16, encp16, input_ids, decoder_hidden))
    assert logits16.shape == (BATCH, OUTPUT_DIM) and h16.shape == (BATCH, DEC_HID)
    assert bool(jnp.all(jnp.isfinite(logits16))) and bool(jnp.all(jnp.isfinite(h16)))
    assert jnp.allclose(logits16, ref_logits, atol=1.5e-1, rtol=1e-1)
    assert jnp.allclose(h16, ref_h, atol=1.5e-1, rtol=1e-1)

    print("KERNEL_OK")
</pallas_src>

<mosaic_0001>
module attributes {stable_mosaic.version = 11 : i64} {
  func.func @decoder_kernel(%arg0: memref<8x128xf32, #tpu.memory_space<vmem>>, %arg1: memref<8x128xf32, #tpu.memory_space<vmem>>, %arg2: memref<8x8x128xf32, #tpu.memory_space<vmem>>, %arg3: memref<8x8x128xf32, #tpu.memory_space<vmem>>, %arg4: memref<128x128xf32, #tpu.memory_space<vmem>>, %arg5: memref<256x384xf32, #tpu.memory_space<vmem>>, %arg6: memref<1x384xf32, #tpu.memory_space<vmem>>, %arg7: memref<128x384xf32, #tpu.memory_space<vmem>>, %arg8: memref<1x384xf32, #tpu.memory_space<vmem>>, %arg9: memref<384x128xf32, #tpu.memory_space<vmem>>, %arg10: memref<1x128xf32, #tpu.memory_space<vmem>>, %arg11: memref<8x128xf32, #tpu.memory_space<vmem>>, %arg12: memref<8x128xf32, #tpu.memory_space<vmem>>, %arg13: memref<8x256xf32, #tpu.memory_space<vmem>>, %arg14: memref<8x384xf32, #tpu.memory_space<vmem>>) attributes {dimension_semantics = [], scalar_prefetch = 0 : i64, scratch_operands = 2 : i64, tpu.core_type = #tpu.core_type<tc>} {
    %c0 = arith.constant 0 : index
    %c0_0 = arith.constant 0 : index
    %0 = vector.load %arg0[%c0, %c0_0] : memref<8x128xf32, #tpu.memory_space<vmem>>, vector<8x128xf32>
    %c0_1 = arith.constant 0 : index
    %c0_2 = arith.constant 0 : index
    %1 = vector.load %arg1[%c0_1, %c0_2] : memref<8x128xf32, #tpu.memory_space<vmem>>, vector<8x128xf32>
    %c0_3 = arith.constant 0 : index
    %c0_4 = arith.constant 0 : index
    %c0_5 = arith.constant 0 : index
    %2 = vector.load %arg2[%c0_3, %c0_4, %c0_5] : memref<8x8x128xf32, #tpu.memory_space<vmem>>, vector<8x8x128xf32>
    %c0_6 = arith.constant 0 : index
    %c0_7 = arith.constant 0 : index
    %3 = vector.load %arg4[%c0_6, %c0_7] : memref<128x128xf32, #tpu.memory_space<vmem>>, vector<128x128xf32>
    %cst = arith.constant dense<0.000000e+00> : vector<8x128xf32>
    %4 = tpu.matmul %1, %3, %cst {dimension_numbers = #tpu.dot_dimension_numbers<[1], [0], [0], [1], [0, 0, 1, 1], [], []>} : vector<8x128xf32>, vector<128x128xf32>, vector<8x128xf32> -> vector<8x128xf32>
    %c0_8 = arith.constant 0 : index
    %c0_9 = arith.constant 0 : index
    %c0_10 = arith.constant 0 : index
    %5 = vector.load %arg3[%c0_8, %c0_9, %c0_10] : memref<8x8x128xf32, #tpu.memory_space<vmem>>, vector<8x8x128xf32>
    %6 = vector.shape_cast %4 : vector<8x128xf32> to vector<8x1x128xf32>
    %7 = vector.broadcast %6 : vector<8x1x128xf32> to vector<8x8x128xf32>
    %8 = arith.addf %5, %7 : vector<8x8x128xf32>
    %9 = math.tanh %8 : vector<8x8x128xf32>
    %cst_11 = arith.constant dense<0.000000e+00> : vector<8x8xf32>
    %10 = vector.multi_reduction <add>, %9, %cst_11 [2] : vector<8x8x128xf32> to vector<8x8xf32>
    %cst_12 = arith.constant dense<0xFF800000> : vector<8xf32>
    %11 = vector.multi_reduction <maximumf>, %10, %cst_12 [1] : vector<8x8xf32> to vector<8xf32>
    %12 = vector.shape_cast %11 : vector<8xf32> to vector<8x1xf32>
    %13 = vector.broadcast %12 : vector<8x1xf32> to vector<8x8xf32>
    %14 = arith.subf %10, %13 : vector<8x8xf32>
    %15 = math.exp %14 : vector<8x8xf32>
    %cst_13 = arith.constant dense<0.000000e+00> : vector<8xf32>
    %16 = vector.multi_reduction <add>, %15, %cst_13 [1] : vector<8x8xf32> to vector<8xf32>
    %17 = vector.shape_cast %16 : vector<8xf32> to vector<8x1xf32>
    %18 = vector.broadcast %17 : vector<8x1xf32> to vector<8x8xf32>
    %19 = arith.divf %15, %18 : vector<8x8xf32>
    %20 = vector.shape_cast %19 : vector<8x8xf32> to vector<8x8x1xf32>
    %21 = vector.broadcast %20 : vector<8x8x1xf32> to vector<8x8x128xf32>
    %22 = arith.mulf %21, %2 : vector<8x8x128xf32>
    %cst_14 = arith.constant dense<0.000000e+00> : vector<8x128xf32>
    %23 = vector.multi_reduction <add>, %22, %cst_14 [1] : vector<8x8x128xf32> to vector<8x128xf32>
    %c0_15 = arith.constant 0 : index
    %c0_16 = arith.constant 0 : index
    %24 = vector.load %arg13[%c0_15, %c0_16] : memref<8x256xf32, #tpu.memory_space<vmem>>, vector<8x128xf32>
    tpu.vector_store %arg13[%c0_15, %c0_16], %0 {strides = array<i32>} : memref<8x256xf32, #tpu.memory_space<vmem>>, vector<8x128xf32>,
    %c0_17 = arith.constant 0 : index
    %c128 = arith.constant 128 : index
    %25 = vector.load %arg13[%c0_17, %c128] : memref<8x256xf32, #tpu.memory_space<vmem>>, vector<8x128xf32>
    tpu.vector_store %arg13[%c0_17, %c128], %23 {strides = array<i32>} : memref<8x256xf32, #tpu.memory_space<vmem>>, vector<8x128xf32>,
    %c0_18 = arith.constant 0 : index
    %c0_19 = arith.constant 0 : index
    %26 = vector.load %arg13[%c0_18, %c0_19] : memref<8x256xf32, #tpu.memory_space<vmem>>, vector<8x256xf32>
    %c0_20 = arith.constant 0 : index
    %c0_21 = arith.constant 0 : index
    %27 = vector.load %arg5[%c0_20, %c0_21] : memref<256x384xf32, #tpu.memory_space<vmem>>, vector<256x384xf32>
    %cst_22 = arith.constant dense<0.000000e+00> : vector<8x384xf32>
    %28 = tpu.matmul %26, %27, %cst_22 {dimension_numbers = #tpu.dot_dimension_numbers<[1], [0], [0], [1], [0, 0, 1, 1], [], []>} : vector<8x256xf32>, vector<256x384xf32>, vector<8x384xf32> -> vector<8x384xf32>
    %c0_23 = arith.constant 0 : index
    %c0_24 = arith.constant 0 : index
    %29 = vector.load %arg6[%c0_23, %c0_24] : memref<1x384xf32, #tpu.memory_space<vmem>>, vector<1x384xf32>
    %30 = vector.broadcast %29 : vector<1x384xf32> to vector<8x384xf32>
    %31 = arith.addf %28, %30 : vector<8x384xf32>
    %c0_25 = arith.constant 0 : index
    %c0_26 = arith.constant 0 : index
    %32 = vector.load %arg7[%c0_25, %c0_26] : memref<128x384xf32, #tpu.memory_space<vmem>>, vector<128x384xf32>
    %cst_27 = arith.constant dense<0.000000e+00> : vector<8x384xf32>
    %33 = tpu.matmul %1, %32, %cst_27 {dimension_numbers = #tpu.dot_dimension_numbers<[1], [0], [0], [1], [0, 0, 1, 1], [], []>} : vector<8x128xf32>, vector<128x384xf32>, vector<8x384xf32> -> vector<8x384xf32>
    %c0_28 = arith.constant 0 : index
    %c0_29 = arith.constant 0 : index
    %34 = vector.load %arg8[%c0_28, %c0_29] : memref<1x384xf32, #tpu.memory_space<vmem>>, vector<1x384xf32>
    %35 = vector.broadcast %34 : vector<1x384xf32> to vector<8x384xf32>
    %36 = arith.addf %33, %35 : vector<8x384xf32>
    %37 = vector.extract_strided_slice %31 {offsets = [0, 0], sizes = [8, 128], strides = [1, 1]} : vector<8x384xf32> to vector<8x128xf32>
    %38 = vector.extract_strided_slice %36 {offsets = [0, 0], sizes = [8, 128], strides = [1, 1]} : vector<8x384xf32> to vector<8x128xf32>
    %39 = arith.addf %37, %38 : vector<8x128xf32>
    %40 = arith.negf %39 : vector<8x128xf32>
    %41 = math.exp %40 : vector<8x128xf32>
    %cst_30 = arith.constant 1.000000e+00 : f32
    %42 = vector.broadcast %cst_30 : f32 to vector<8x128xf32>
    %43 = arith.addf %42, %41 : vector<8x128xf32>
    %44 = arith.divf %42, %43 : vector<8x128xf32>
    %45 = vector.extract_strided_slice %31 {offsets = [0, 128], sizes = [8, 128], strides = [1, 1]} : vector<8x384xf32> to vector<8x128xf32>
    %46 = vector.extract_strided_slice %36 {offsets = [0, 128], sizes = [8, 128], strides = [1, 1]} : vector<8x384xf32> to vector<8x128xf32>
    %47 = arith.addf %45, %46 : vector<8x128xf32>
    %48 = arith.negf %47 : vector<8x128xf32>
    %49 = math.exp %48 : vector<8x128xf32>
    %cst_31 = arith.constant 1.000000e+00 : f32
    %50 = vector.broadcast %cst_31 : f32 to vector<8x128xf32>
    %51 = arith.addf %50, %49 : vector<8x128xf32>
    %52 = arith.divf %50, %51 : vector<8x128xf32>
    %53 = vector.extract_strided_slice %31 {offsets = [0, 256], sizes = [8, 128], strides = [1, 1]} : vector<8x384xf32> to vector<8x128xf32>
    %54 = vector.extract_strided_slice %36 {offsets = [0, 256], sizes = [8, 128], strides = [1, 1]} : vector<8x384xf32> to vector<8x128xf32>
    %55 = arith.mulf %44, %54 : vector<8x128xf32>
    %56 = arith.addf %53, %55 : vector<8x128xf32>
    %57 = math.tanh %56 : vector<8x128xf32>
    %cst_32 = arith.constant 1.000000e+00 : f32
    %58 = vector.broadcast %cst_32 : f32 to vector<8x128xf32>
    %59 = arith.subf %58, %52 : vector<8x128xf32>
    %60 = arith.mulf %59, %57 : vector<8x128xf32>
    %61 = arith.mulf %52, %1 : vector<8x128xf32>
    %62 = arith.addf %60, %61 : vector<8x128xf32>
    %c0_33 = arith.constant 0 : index
    %c0_34 = arith.constant 0 : index
    %63 = vector.load %arg14[%c0_33, %c0_34] : memref<8x384xf32, #tpu.memory_space<vmem>>, vector<8x128xf32>
    tpu.vector_store %arg14[%c0_33, %c0_34], %62 {strides = array<i32>} : memref<8x384xf32, #tpu.memory_space<vmem>>, vector<8x128xf32>,
    %c0_35 = arith.constant 0 : index
    %c128_36 = arith.constant 128 : index
    %64 = vector.load %arg14[%c0_35, %c128_36] : memref<8x384xf32, #tpu.memory_space<vmem>>, vector<8x128xf32>
    tpu.vector_store %arg14[%c0_35, %c128_36], %23 {strides = array<i32>} : memref<8x384xf32, #tpu.memory_space<vmem>>, vector<8x128xf32>,
    %c0_37 = arith.constant 0 : index
    %c256 = arith.constant 256 : index
    %65 = vector.load %arg14[%c0_37, %c256] : memref<8x384xf32, #tpu.memory_space<vmem>>, vector<8x128xf32>
    tpu.vector_store %arg14[%c0_37, %c256], %0 {strides = array<i32>} : memref<8x384xf32, #tpu.memory_space<vmem>>, vector<8x128xf32>,
    %c0_38 = arith.constant 0 : index
    %c0_39 = arith.constant 0 : index
    %66 = vector.load %arg14[%c0_38, %c0_39] : memref<8x384xf32, #tpu.memory_space<vmem>>, vector<8x384xf32>
    %c0_40 = arith.constant 0 : index
    %c0_41 = arith.constant 0 : index
    %67 = vector.load %arg9[%c0_40, %c0_41] : memref<384x128xf32, #tpu.memory_space<vmem>>, vector<384x128xf32>
    %cst_42 = arith.constant dense<0.000000e+00> : vector<8x128xf32>
    %68 = tpu.matmul %66, %67, %cst_42 {dimension_numbers = #tpu.dot_dimension_numbers<[1], [0], [0], [1], [0, 0, 1, 1], [], []>} : vector<8x384xf32>, vector<384x128xf32>, vector<8x128xf32> -> vector<8x128xf32>
    %c0_43 = arith.constant 0 : index
    %c0_44 = arith.constant 0 : index
    %69 = vector.load %arg10[%c0_43, %c0_44] : memref<1x128xf32, #tpu.memory_space<vmem>>, vector<1x128xf32>
    %70 = vector.broadcast %69 : vector<1x128xf32> to vector<8x128xf32>
    %71 = arith.addf %68, %70 : vector<8x128xf32>
    %c0_45 = arith.constant 0 : index
    %c0_46 = arith.constant 0 : index
    %72 = vector.load %arg11[%c0_45, %c0_46] : memref<8x128xf32, #tpu.memory_space<vmem>>, vector<8x128xf32>
    tpu.vector_store %arg11[%c0_45, %c0_46], %71 {strides = array<i32>} : memref<8x128xf32, #tpu.memory_space<vmem>>, vector<8x128xf32>,
    %c0_47 = arith.constant 0 : index
    %c0_48 = arith.constant 0 : index
    %73 = vector.load %arg12[%c0_47, %c0_48] : memref<8x128xf32, #tpu.memory_space<vmem>>, vector<8x128xf32>
    tpu.vector_store %arg12[%c0_47, %c0_48], %62 {strides = array<i32>} : memref<8x128xf32, #tpu.memory_space<vmem>>, vector<8x128xf32>,
    return
  }
}

</mosaic_0001>

<llo_original>
// kernel: tpu_custom_call.1
$region0: #{tpu_custom_call.1}
  #allocation0 [shape = 'u32[]', space=smem, size = 0x4, offset = 0x4, fixed_abs, tag = 'smem constant byte address 0x4 - core index']
  #allocation1 [shape = 'u32[144,128]{1,0:T(1,128)}', space=vmem, size = 0x12000, scoped, tag = 'internal scratch']
  #allocation2 [shape = 'f32[8,256]{1,0:T(8,128)}', space=vmem, size = 0x2000, scoped, tag = 'scratch operand']
  #allocation3 [shape = 'f32[8,384]{1,0:T(8,128)}', space=vmem, size = 0x3000, scoped, tag = 'scratch operand']
  %s0 = inlined_call_operand.hbm [shape: f32[8,128], index: 0, kind: input, shape index: {}]
  %s1 = inlined_call_operand.hbm [shape: f32[8,128], index: 1, kind: input, shape index: {}]
  %s2 = inlined_call_operand.hbm [shape: f32[8,8,128], index: 2, kind: input, shape index: {}]
  %s3 = inlined_call_operand.hbm [shape: f32[8,8,128], index: 3, kind: input, shape index: {}]
  %s4 = inlined_call_operand.hbm [shape: f32[128,128], index: 4, kind: input, shape index: {}]
  %s5 = inlined_call_operand.hbm [shape: f32[256,384], index: 5, kind: input, shape index: {}]
  %s6 = inlined_call_operand.vmem [shape: f32[1,384], index: 6, kind: input, shape index: {}]
  %s7 = inlined_call_operand.hbm [shape: f32[128,384], index: 7, kind: input, shape index: {}]
  %s8 = inlined_call_operand.vmem [shape: f32[1,384], index: 8, kind: input, shape index: {}]
  %s9 = inlined_call_operand.hbm [shape: f32[384,128], index: 9, kind: input, shape index: {}]
  %s10 = inlined_call_operand.vmem [shape: f32[1,128], index: 10, kind: input, shape index: {}]
  %s11 = inlined_call_operand.hbm [shape: f32[8,128], index: 11, kind: output, shape index: {0}]
  %s12 = inlined_call_operand.hbm [shape: f32[8,128], index: 12, kind: output, shape index: {1}]
  %13 = xla_tuple %s11, %s12
  %s14 = sld [smem:[#allocation0]]
  $region94: #{tpu_custom_call.1} parent=0
    _
  %s16 = ssub.s32 1, %s14
  %s17 = scalar_select 0, %s16, %s14
  $region1: #{tpu_custom_call.1} parent=0
    #allocation4 [shape = 'u8[4096]{0}', space=vmem, size = 0x1000, scoped, tag = 'input window, operand 0, single buffered']
    #allocation5 [shape = 's32[1]{0}', space=sflag, size = 0x4, scoped, tag = 'scoped memory for tpu_custom_call.1']
    #allocation6 [shape = 's32[1]{0}', space=sflag, size = 0x4, scoped, tag = 'scoped memory for tpu_custom_call.1']
    #allocation7 [shape = 'u8[4096]{0}', space=vmem, size = 0x1000, scoped, tag = 'input window, operand 1, single buffered']
    #allocation8 [shape = 's32[1]{0}', space=sflag, size = 0x4, scoped, tag = 'scoped memory for tpu_custom_call.1']
    #allocation9 [shape = 'u8[32768]{0}', space=vmem, size = 0x8000, scoped, tag = 'input window, operand 2, single buffered']
    #allocation10 [shape = 'u8[32768]{0}', space=vmem, size = 0x8000, scoped, tag = 'input window, operand 3, single buffered']
    #allocation11 [shape = 's32[1]{0}', space=sflag, size = 0x4, scoped, tag = 'scoped memory for tpu_custom_call.1']
    #allocation12 [shape = 'u8[65536]{0}', space=vmem, size = 0x10000, scoped, tag = 'input window, operand 4, single buffered']
    #allocation13 [shape = 'u8[393216]{0}', space=vmem, size = 0x60000, scoped, tag = 'input window, operand 5, single buffered']
    #allocation14 [shape = 's32[1]{0}', space=sflag, size = 0x4, scoped, tag = 'scoped memory for tpu_custom_call.1']
    #allocation15 [shape = 'u8[196608]{0}', space=vmem, size = 0x30000, scoped, tag = 'input window, operand 7, single buffered']
    #allocation16 [shape = 'u8[196608]{0}', space=vmem, size = 0x30000, scoped, tag = 'input window, operand 9, single buffered']
    #allocation17 [shape = 's32[1]{0}', space=sflag, size = 0x4, scoped, tag = 'scoped memory for tpu_custom_call.1']
    #allocation18 [shape = 'u8[4096]{0}', space=vmem, size = 0x1000, scoped, tag = 'output window, operand 0, single buffered']
    #allocation19 [shape = 'u8[4096]{0}', space=vmem, size = 0x1000, scoped, tag = 'output window, operand 1, single buffered']
    #allocation20 [shape = 's32[1]{0}', space=sflag, size = 0x4, scoped, tag = 'scoped memory for tpu_custom_call.1']
    %18 = vsyncpa [#allocation5], 0
    %19 = vsyncpa [#allocation8], 0
    %20 = vsyncpa [#allocation11], 0
    %21 = vsyncpa [#allocation14], 0
    %22 = vsyncpa [#allocation17], 0
    %23 = vsyncpa [#allocation6], 0
    %24 = vsyncpa [#allocation20], 0
    // Predicated region
    $region2: #{tpu_custom_call.1} parent=1 // pred_check
      _
    $region3: #{tpu_custom_call.1} parent=1 // pred_check_branch
      %26 = sbr.rel (0) target = $region5
    $region4: #{tpu_custom_call.1} parent=1 // pred_region
      %s28 = ssub.s32 128, 128
      %29 = vsyncadd [#allocation5], %s28
      %s31 = sshll.u32 [#allocation4], 4
      %s32 = int_to_ptr.vmem [resolvable:$true] %s31
      %34 = dma.hbm_to_vmem [thread:$0]  %s0, 128, %s32, [#allocation5]
    $region5: #{tpu_custom_call.1} parent=1 // pred_fallthru
      _
    // Predicated region
    $region6: #{tpu_custom_call.1} parent=1 // pred_check
      _
    $region7: #{tpu_custom_call.1} parent=1 // pred_check_branch
      %36 = sbr.rel (0) target = $region9
    $region8: #{tpu_custom_call.1} parent=1 // pred_region
      %s38 = ssub.s32 128, 128
      %39 = vsyncadd [#allocation8], %s38
      %s41 = sshll.u32 [#allocation7], 4
      %s42 = int_to_ptr.vmem [resolvable:$true] %s41
      %44 = dma.hbm_to_vmem [thread:$0]  %s1, 128, %s42, [#allocation8]
    $region9: #{tpu_custom_call.1} parent=1 // pred_fallthru
      _
    // Predicated region
    $region10: #{tpu_custom_call.1} parent=1 // pred_check
      _
    $region11: #{tpu_custom_call.1} parent=1 // pred_check_branch
      %46 = sbr.rel (0) target = $region13
    $region12: #{tpu_custom_call.1} parent=1 // pred_region
      %s48 = ssub.s32 1024, 1024
      %49 = vsyncadd [#allocation8], %s48
      %s50 = sshll.u32 [#allocation9], 4
      %s51 = int_to_ptr.vmem [resolvable:$true] %s50
      %56 = dma.hbm_to_vmem [thread:$0]  %s2, 1024, %s51, [#allocation8], 128, 128, 8
    $region13: #{tpu_custom_call.1} parent=1 // pred_fallthru
      _
    // Predicated region
    $region14: #{tpu_custom_call.1} parent=1 // pred_check
      _
    $region15: #{tpu_custom_call.1} parent=1 // pred_check_branch
      %58 = sbr.rel (0) target = $region17
    $region16: #{tpu_custom_call.1} parent=1 // pred_region
      %s60 = ssub.s32 1024, 1024
      %61 = vsyncadd [#allocation11], %s60
      %s62 = sshll.u32 [#allocation10], 4
      %s63 = int_to_ptr.vmem [resolvable:$true] %s62
      %68 = dma.hbm_to_vmem [thread:$0]  %s3, 1024, %s63, [#allocation11], 128, 128, 8
    $region17: #{tpu_custom_call.1} parent=1 // pred_fallthru
      _
    // Predicated region
    $region18: #{tpu_custom_call.1} parent=1 // pred_check
      _
    $region19: #{tpu_custom_call.1} parent=1 // pred_check_branch
      %70 = sbr.rel (0) target = $region21
    $region20: #{tpu_custom_call.1} parent=1 // pred_region
      %s72 = ssub.s32 2048, 2048
      %73 = vsyncadd [#allocation11], %s72
      %s74 = sshll.u32 [#allocation12], 4
      %s75 = int_to_ptr.vmem [resolvable:$true] %s74
      %80 = dma.hbm_to_vmem [thread:$0]  %s4, 2048, %s75, [#allocation11], 128, 128, 8
    $region21: #{tpu_custom_call.1} parent=1 // pred_fallthru
      _
    // Predicated region
    $region22: #{tpu_custom_call.1} parent=1 // pred_check
      _
    $region23: #{tpu_custom_call.1} parent=1 // pred_check_branch
      %82 = sbr.rel (0) target = $region25
    $region24: #{tpu_custom_call.1} parent=1 // pred_region
      %s84 = ssub.s32 12288, 12288
      %85 = vsyncadd [#allocation14], %s84
      %s86 = sshll.u32 [#allocation13], 4
      %s87 = int_to_ptr.vmem [resolvable:$true] %s86
      %92 = dma.hbm_to_vmem [thread:$0]  %s5, 12288, %s87, [#allocation14], 384, 384, 24
    $region25: #{tpu_custom_call.1} parent=1 // pred_fallthru
      _
    // Predicated region
    $region26: #{tpu_custom_call.1} parent=1 // pred_check
      _
    $region27: #{tpu_custom_call.1} parent=1 // pred_check_branch
      %94 = sbr.rel (0) target = $region29
    $region28: #{tpu_custom_call.1} parent=1 // pred_region
      _
    $region29: #{tpu_custom_call.1} parent=1 // pred_fallthru
      _
    // Predicated region
    $region30: #{tpu_custom_call.1} parent=1 // pred_check
      _
    $region31: #{tpu_custom_call.1} parent=1 // pred_check_branch
      %96 = sbr.rel (0) target = $region33
    $region32: #{tpu_custom_call.1} parent=1 // pred_region
      %s98 = ssub.s32 6144, 6144
      %99 = vsyncadd [#allocation14], %s98
      %s100 = sshll.u32 [#allocation15], 4
      %s101 = int_to_ptr.vmem [resolvable:$true] %s100
      %106 = dma.hbm_to_vmem [thread:$0]  %s7, 6144, %s101, [#allocation14], 384, 384, 24
    $region33: #{tpu_custom_call.1} parent=1 // pred_fallthru
      _
    // Predicated region
    $region34: #{tpu_custom_call.1} parent=1 // pred_check
      _
    $region35: #{tpu_custom_call.1} parent=1 // pred_check_branch
      %108 = sbr.rel (0) target = $region37
    $region36: #{tpu_custom_call.1} parent=1 // pred_region
      _
    $region37: #{tpu_custom_call.1} parent=1 // pred_fallthru
      _
    // Predicated region
    $region38: #{tpu_custom_call.1} parent=1 // pred_check
      _
    $region39: #{tpu_custom_call.1} parent=1 // pred_check_branch
      %110 = sbr.rel (0) target = $region41
    $region40: #{tpu_custom_call.1} parent=1 // pred_region
      %s112 = ssub.s32 6144, 6144
      %113 = vsyncadd [#allocation17], %s112
      %s114 = sshll.u32 [#allocation16], 4
      %s115 = int_to_ptr.vmem [resolvable:$true] %s114
      %120 = dma.hbm_to_vmem [thread:$0]  %s9, 6144, %s115, [#allocation17], 128, 128, 8
    $region41: #{tpu_custom_call.1} parent=1 // pred_fallthru
      _
    // Predicated region
    $region42: #{tpu_custom_call.1} parent=1 // pred_check
      _
    $region43: #{tpu_custom_call.1} parent=1 // pred_check_branch
      %122 = sbr.rel (0) target = $region45
    $region44: #{tpu_custom_call.1} parent=1 // pred_region
      _
    $region45: #{tpu_custom_call.1} parent=1 // pred_fallthru
      _
    // Predicated region
    $region46: #{tpu_custom_call.1} parent=1 // pred_check
      _
    $region47: #{tpu_custom_call.1} parent=1 // pred_check_branch
      %124 = sbr.rel (0) target = $region49
    $region48: #{tpu_custom_call.1} parent=1 // pred_region
      %125 = dma.done [#allocation5], 128
    $region49: #{tpu_custom_call.1} parent=1 // pred_fallthru
      _
    // Predicated region
    $region50: #{tpu_custom_call.1} parent=1 // pred_check
      _
    $region51: #{tpu_custom_call.1} parent=1 // pred_check_branch
      %127 = sbr.rel (0) target = $region53
    $region52: #{tpu_custom_call.1} parent=1 // pred_region
      %128 = dma.done [#allocation8], 128
    $region53: #{tpu_custom_call.1} parent=1 // pred_fallthru
      _
    // Predicated region
    $region54: #{tpu_custom_call.1} parent=1 // pred_check
      _
    $region55: #{tpu_custom_call.1} parent=1 // pred_check_branch
      %130 = sbr.rel (0) target = $region57
    $region56: #{tpu_custom_call.1} parent=1 // pred_region
      %131 = dma.done [#allocation8], 1024
    $region57: #{tpu_custom_call.1} parent=1 // pred_fallthru
      _
    // Predicated region
    $region58: #{tpu_custom_call.1} parent=1 // pred_check
      _
    $region59: #{tpu_custom_call.1} parent=1 // pred_check_branch
      %133 = sbr.rel (0) target = $region61
    $region60: #{tpu_custom_call.1} parent=1 // pred_region
      %134 = dma.done [#allocation11], 1024
    $region61: #{tpu_custom_call.1} parent=1 // pred_fallthru
      _
    // Predicated region
    $region62: #{tpu_custom_call.1} parent=1 // pred_check
      _
    $region63: #{tpu_custom_call.1} parent=1 // pred_check_branch
      %136 = sbr.rel (0) target = $region65
    $region64: #{tpu_custom_call.1} parent=1 // pred_region
      %137 = dma.done [#allocation11], 2048
    $region65: #{tpu_custom_call.1} parent=1 // pred_fallthru
      _
    // Predicated region
    $region66: #{tpu_custom_call.1} parent=1 // pred_check
      _
    $region67: #{tpu_custom_call.1} parent=1 // pred_check_branch
      %139 = sbr.rel (0) target = $region69
    $region68: #{tpu_custom_call.1} parent=1 // pred_region
      %140 = dma.done [#allocation14], 12288
    $region69: #{tpu_custom_call.1} parent=1 // pred_fallthru
      _
    // Predicated region
    $region70: #{tpu_custom_call.1} parent=1 // pred_check
      _
    $region71: #{tpu_custom_call.1} parent=1 // pred_check_branch
      %142 = sbr.rel (0) target = $region73
    $region72: #{tpu_custom_call.1} parent=1 // pred_region
      %143 = dma.done [#allocation14], 6144
    $region73: #{tpu_custom_call.1} parent=1 // pred_fallthru
      _
    // Predicated region
    $region74: #{tpu_custom_call.1} parent=1 // pred_check
      _
    $region75: #{tpu_custom_call.1} parent=1 // pred_check_branch
      %145 = sbr.rel (0) target = $region77
    $region76: #{tpu_custom_call.1} parent=1 // pred_region
      %146 = dma.done [#allocation17], 6144
    $region77: #{tpu_custom_call.1} parent=1 // pred_fallthru
      _
    %v147 = vld [vmem:[#allocation4] sm:$0xff]
    %v148 = vld [vmem:[#allocation7] sm:$0xff]
    %v149 = vld [vmem:[#allocation9] sm:$0xff]
    %v150 = vld [vmem:[#allocation9 + $0x8] sm:$0xff]
    %v151 = vld [vmem:[#allocation9 + $0x10] sm:$0xff]
    %v152 = vld [vmem:[#allocation9 + $0x18] sm:$0xff]
    %v153 = vld [vmem:[#allocation9 + $0x20] sm:$0xff]
    %v154 = vld [vmem:[#allocation9 + $0x28] sm:$0xff]
    %v155 = vld [vmem:[#allocation9 + $0x30] sm:$0xff]
    %v156 = vld [vmem:[#allocation9 + $0x38] sm:$0xff]
    %v157 = vld [vmem:[#allocation12] sm:$0xff]
    %v158 = vld [vmem:[#allocation12 + $0x8] sm:$0xff]
    %v159 = vld [vmem:[#allocation12 + $0x10] sm:$0xff]
    %v160 = vld [vmem:[#allocation12 + $0x18] sm:$0xff]
    %v161 = vld [vmem:[#allocation12 + $0x20] sm:$0xff]
    %v162 = vld [vmem:[#allocation12 + $0x28] sm:$0xff]
    %v163 = vld [vmem:[#allocation12 + $0x30] sm:$0xff]
    %v164 = vld [vmem:[#allocation12 + $0x38] sm:$0xff]
    %v165 = vld [vmem:[#allocation12 + $0x40] sm:$0xff]
    %v166 = vld [vmem:[#allocation12 + $0x48] sm:$0xff]
    %v167 = vld [vmem:[#allocation12 + $0x50] sm:$0xff]
    %v168 = vld [vmem:[#allocation12 + $0x58] sm:$0xff]
    %v169 = vld [vmem:[#allocation12 + $0x60] sm:$0xff]
    %v170 = vld [vmem:[#allocation12 + $0x68] sm:$0xff]
    %v171 = vld [vmem:[#allocation12 + $0x70] sm:$0xff]
    %v172 = vld [vmem:[#allocation12 + $0x78] sm:$0xff]
    %173 = vmatprep.subr.mxu0 0.0
    %174 = vmatpush1.msra.mxu0 %v157
    %175 = vmatprep.subr.mxu0 0.0
    %176 = vmatpush1.msra.mxu0 %v158
    %177 = vmatprep.subr.mxu0 0.0
    %178 = vmatpush1.msra.mxu0 %v159
    %179 = vmatprep.subr.mxu0 0.0
    %180 = vmatpush1.msra.mxu0 %v160
    %181 = vmatprep.subr.mxu0 0.0
    %182 = vmatpush1.msra.mxu0 %v161
    %183 = vmatprep.subr.mxu0 0.0
    %184 = vmatpush1.msra.mxu0 %v162
    %185 = vmatprep.subr.mxu0 0.0
    %186 = vmatpush1.msra.mxu0 %v163
    %187 = vmatprep.subr.mxu0 0.0
    %188 = vmatpush1.msra.mxu0 %v164
    %189 = vmatprep.subr.mxu0 0.0
    %190 = vmatpush1.msra.mxu0 %v165
    %191 = vmatprep.subr.mxu0 0.0
    %192 = vmatpush1.msra.mxu0 %v166
    %193 = vmatprep.subr.mxu0 0.0
    %194 = vmatpush1.msra.mxu0 %v167
    %195 = vmatprep.subr.mxu0 0.0
    %196 = vmatpush1.msra.mxu0 %v168
    %197 = vmatprep.subr.mxu0 0.0
    %198 = vmatpush1.msra.mxu0 %v169
    %199 = vmatprep.subr.mxu0 0.0
    %200 = vmatpush1.msra.mxu0 %v170
    %201 = vmatprep.subr.mxu0 0.0
    %202 = vmatpush1.msra.mxu0 %v171
    %203 = vmatprep.subr.mxu0 0.0
    %204 = vmatpush1.msra.mxu0 %v172
    %205 = vmatprep.subr.mxu0 0.0
    %206 = vmatpush1.msra.mxu0 0.0
    %207 = vmatprep.subr.mxu0 0.0
    %208 = vmatpush1.msra.mxu0 0.0
    %209 = vmatprep.subr.mxu0 0.0
    %210 = vmatpush1.msra.mxu0 0.0
    %211 = vmatprep.subr.mxu0 0.0
    %212 = vmatpush1.msra.mxu0 0.0
    %213 = vmatprep.subr.mxu0 0.0
    %214 = vmatpush1.msra.mxu0 0.0
    %215 = vmatprep.subr.mxu0 0.0
    %216 = vmatpush1.msra.mxu0 0.0
    %217 = vmatprep.subr.mxu0 0.0
    %218 = vmatpush1.msra.mxu0 0.0
    %219 = vmatprep.subr.mxu0 0.0
    %220 = vmatpush1.msra.mxu0 0.0
    %221 = vmatprep.subr.mxu0 0.0
    %222 = vmatpush1.msra.mxu0 0.0
    %223 = vmatprep.subr.mxu0 0.0
    %224 = vmatpush1.msra.mxu0 0.0
    %225 = vmatprep.subr.mxu0 0.0
    %226 = vmatpush1.msra.mxu0 0.0
    %227 = vmatprep.subr.mxu0 0.0
    %228 = vmatpush1.msra.mxu0 0.0
    %229 = vmatprep.subr.mxu0 0.0
    %230 = vmatpush1.msra.mxu0 0.0
    %231 = vmatprep.subr.mxu0 0.0
    %232 = vmatpush1.msra.mxu0 0.0
    %233 = vmatprep.subr.mxu0 0.0
    %234 = vmatpush1.msra.mxu0 0.0
    %235 = vmatprep.subr.mxu0 0.0
    %236 = vmatpush1.msra.mxu0 0.0
    %237 = vmatprep.mubr.f32.mxu0 0.0
    %238 = vmatmul.mubr.f32.gmra.mrb[0].mxu0 %v148
    %v239 = vpop.f32.mrb[0].mxu0
    %v240 = vadd.f32 0.0, %v239
    %v241 = vpop.f32.mrb[0].mxu0
    %242 = vdwg.mxu0
    %v243 = vld [vmem:[#allocation10] sm:$0xff]
    %v244 = vld [vmem:[#allocation10 + $0x8] sm:$0xff]
    %v245 = vld [vmem:[#allocation10 + $0x10] sm:$0xff]
    %v246 = vld [vmem:[#allocation10 + $0x18] sm:$0xff]
    %v247 = vld [vmem:[#allocation10 + $0x20] sm:$0xff]
    %v248 = vld [vmem:[#allocation10 + $0x28] sm:$0xff]
    %v249 = vld [vmem:[#allocation10 + $0x30] sm:$0xff]
    %v250 = vld [vmem:[#allocation10 + $0x38] sm:$0xff]
    %v252 = vcombine.high %v240, %v240
    %v254 = vunpack.c.l.s4 1966171168
    %v255 = vunpack.c.0.s8 %v254
    %v256 = vlaneseq
    %v257 = vshrl.u32 %v256, 7
    %v258 = vsub.s32 %v255, %v257
    %v259 = vrot.slane %v240, %v258
    %v261 = vunpack.c.l.s4 1966171168
    %v262 = vunpack.c.0.s8 %v261
    %v263 = vlaneseq
    %v264 = vshrl.u32 %v263, 7
    %v265 = vsub.s32 %v262, %v264
    %v266 = vrot.slane %v252, %v265
    %v267 = vcombine.high %v259, %v259
    %v268 = vcombine.high %v266, %v266
    %v270 = vunpack.c.l.s4 1966171168
    %v271 = vunpack.c.0.s8 %v270
    %v272 = vlaneseq
    %v273 = vshrl.u32 %v272, 7
    %v274 = vsub.s32 %v271, %v273
    %v275 = vrot.slane %v259, %v274
    %v277 = vunpack.c.l.s4 1966171168
    %v278 = vunpack.c.0.s8 %v277
    %v279 = vlaneseq
    %v280 = vshrl.u32 %v279, 7
    %v281 = vsub.s32 %v278, %v280
    %v282 = vrot.slane %v266, %v281
    %v284 = vunpack.c.l.s4 1966171168
    %v285 = vunpack.c.0.s8 %v284
    %v286 = vlaneseq
    %v287 = vshrl.u32 %v286, 7
    %v288 = vsub.s32 %v285, %v287
    %v289 = vrot.slane %v267, %v288
    %v291 = vunpack.c.l.s4 1966171168
    %v292 = vunpack.c.0.s8 %v291
    %v293 = vlaneseq
    %v294 = vshrl.u32 %v293, 7
    %v295 = vsub.s32 %v292, %v294
    %v296 = vrot.slane %v268, %v295
    %v297 = vcombine.high %v275, %v275
    %v298 = vcombine.high %v282, %v282
    %v299 = vcombine.high %v289, %v289
    %v300 = vcombine.high %v296, %v296
    %v301 = vlaneseq
    %v302 = vshrl.u32 %v301, 7
    %v303 = vsub.s32 0, %v302
    %v304 = vrot.slane %v275, %v303
    %v305 = vlaneseq
    %v306 = vshrl.u32 %v305, 7
    %v307 = vsub.s32 0, %v306
    %v308 = vrot.slane %v289, %v307
    %v309 = vlaneseq
    %v310 = vshrl.u32 %v309, 7
    %v311 = vsub.s32 0, %v310
    %v312 = vrot.slane %v297, %v311
    %v313 = vlaneseq
    %v314 = vshrl.u32 %v313, 7
    %v315 = vsub.s32 0, %v314
    %v316 = vrot.slane %v299, %v315
    %v317 = vlaneseq
    %v318 = vshrl.u32 %v317, 7
    %v319 = vsub.s32 0, %v318
    %v320 = vrot.slane %v282, %v319
    %v321 = vlaneseq
    %v322 = vshrl.u32 %v321, 7
    %v323 = vsub.s32 0, %v322
    %v324 = vrot.slane %v296, %v323
    %v325 = vlaneseq
    %v326 = vshrl.u32 %v325, 7
    %v327 = vsub.s32 0, %v326
    %v328 = vrot.slane %v298, %v327
    %v329 = vlaneseq
    %v330 = vshrl.u32 %v329, 7
    %v331 = vsub.s32 0, %v330
    %v332 = vrot.slane %v300, %v331
    %v341 = vadd.f32 %v243, %v304
    %v342 = vadd.f32 %v244, %v308
    %v343 = vadd.f32 %v245, %v312
    %v344 = vadd.f32 %v246, %v316
    %v345 = vadd.f32 %v247, %v320
    %v346 = vadd.f32 %v248, %v324
    %v347 = vadd.f32 %v249, %v328
    %v348 = vadd.f32 %v250, %v332
    %v349 = vtanh.pop %v341
    %v350 = vtanh.pop %v342
    %v351 = vtanh.pop %v343
    %v352 = vtanh.pop %v344
    %v353 = vtanh.pop %v345
    %v354 = vtanh.pop %v346
    %v355 = vtanh.pop %v347
    %v356 = vtanh.pop %v348
    %357 = vadd.xlane.f32.xlu0 %v349
    %v358 = vpop.xlane.xlu0 %357
    %359 = vadd.xlane.f32.xlu0 %v350
    %v360 = vpop.xlane.xlu0 %359
    %361 = vadd.xlane.f32.xlu0 %v351
    %v362 = vpop.xlane.xlu0 %361
    %363 = vadd.xlane.f32.xlu0 %v352
    %v364 = vpop.xlane.xlu0 %363
    %365 = vadd.xlane.f32.xlu0 %v353
    %v366 = vpop.xlane.xlu0 %365
    %367 = vadd.xlane.f32.xlu0 %v354
    %v368 = vpop.xlane.xlu0 %367
    %369 = vadd.xlane.f32.xlu0 %v355
    %v370 = vpop.xlane.xlu0 %369
    %371 = vadd.xlane.f32.xlu0 %v356
    %v372 = vpop.xlane.xlu0 %371
    %v381 = vlaneseq
    %v382 = vand.u32 %v381, 127
    %v383 = vlaneseq
    %v384 = vshrl.u32 %v383, 7
    %v385 = vsub.s32 %v382, %v384
    %v386 = vrot.slane %v358, %v385
    %v387 = vlaneseq
    %v388 = vshrl.u32 %v387, 7
    %v389 = vsub.s32 %v382, %v388
    %v390 = vrot.slane %v360, %v389
    %v391 = vlaneseq
    %v392 = vshrl.u32 %v391, 7
    %v393 = vsub.s32 %v382, %v392
    %v394 = vrot.slane %v362, %v393
    %v395 = vlaneseq
    %v396 = vshrl.u32 %v395, 7
    %v397 = vsub.s32 %v382, %v396
    %v398 = vrot.slane %v364, %v397
    %v399 = vlaneseq
    %v400 = vshrl.u32 %v399, 7
    %v401 = vsub.s32 %v382, %v400
    %v402 = vrot.slane %v366, %v401
    %v403 = vlaneseq
    %v404 = vshrl.u32 %v403, 7
    %v405 = vsub.s32 %v382, %v404
    %v406 = vrot.slane %v368, %v405
    %v407 = vlaneseq
    %v408 = vshrl.u32 %v407, 7
    %v409 = vsub.s32 %v382, %v408
    %v410 = vrot.slane %v370, %v409
    %v411 = vlaneseq
    %v412 = vshrl.u32 %v411, 7
    %v413 = vsub.s32 %v382, %v412
    %v414 = vrot.slane %v372, %v413
    %vm415 = vcmask 1041409
    %v416 = vsel %vm415, %v390, %v386
    %vm417 = vcmask 1042434
    %v418 = vsel %vm417, %v394, %v416
    %vm419 = vcmask 1043459
    %v420 = vsel %vm419, %v398, %v418
    %vm421 = vcmask 1044484
    %v422 = vsel %vm421, %v402, %v420
    %vm423 = vcmask 1045509
    %v424 = vsel %vm423, %v406, %v422
    %vm425 = vcmask 1046534
    %v426 = vsel %vm425, %v410, %v424
    %vm427 = vcmask 1047559
    %v428 = vsel %vm427, %v414, %v426
    %vm430 = vcmask 64512
    %v431 = vsel %vm430, %v428, -inf
    %432 = vmax.xlane.f32.xlu0 %v431
    %v433 = vpop.xlane.xlu0 %432
    %v435 = vlaneseq
    %v436 = vshrl.u32 %v435, 7
    %v437 = vsub.s32 0, %v436
    %v438 = vrot.slane %v433, %v437
    %v439 = vlaneseq
    %v440 = vshrl.u32 %v439, 7
    %v441 = vsub.s32 1, %v440
    %v442 = vrot.slane %v433, %v441
    %v443 = vlaneseq
    %v444 = vshrl.u32 %v443, 7
    %v445 = vsub.s32 2, %v444
    %v446 = vrot.slane %v433, %v445
    %v447 = vlaneseq
    %v448 = vshrl.u32 %v447, 7
    %v449 = vsub.s32 3, %v448
    %v450 = vrot.slane %v433, %v449
    %v451 = vlaneseq
    %v452 = vshrl.u32 %v451, 7
    %v453 = vsub.s32 4, %v452
    %v454 = vrot.slane %v433, %v453
    %v455 = vlaneseq
    %v456 = vshrl.u32 %v455, 7
    %v457 = vsub.s32 5, %v456
    %v458 = vrot.slane %v433, %v457
    %v459 = vlaneseq
    %v460 = vshrl.u32 %v459, 7
    %v461 = vsub.s32 6, %v460
    %v462 = vrot.slane %v433, %v461
    %v463 = vlaneseq
    %v464 = vshrl.u32 %v463, 7
    %v465 = vsub.s32 7, %v464
    %v466 = vrot.slane %v433, %v465
    %v475 = vsub.f32 %v358, %v438
    %v476 = vsub.f32 %v360, %v442
    %v477 = vsub.f32 %v362, %v446
    %v478 = vsub.f32 %v364, %v450
    %v479 = vsub.f32 %v366, %v454
    %v480 = vsub.f32 %v368, %v458
    %v481 = vsub.f32 %v370, %v462
    %v482 = vsub.f32 %v372, %v466
    %v483 = vmul.f32 %v475, 1.442695
    %v484 = vpow.pop %v483
    %v485 = vmul.f32 %v476, 1.442695
    %v486 = vpow.pop %v485
    %v487 = vmul.f32 %v477, 1.442695
    %v488 = vpow.pop %v487
    %v489 = vmul.f32 %v478, 1.442695
    %v490 = vpow.pop %v489
    %v491 = vmul.f32 %v479, 1.442695
    %v492 = vpow.pop %v491
    %v493 = vmul.f32 %v480, 1.442695
    %v494 = vpow.pop %v493
    %v495 = vmul.f32 %v481, 1.442695
    %v496 = vpow.pop %v495
    %v497 = vmul.f32 %v482, 1.442695
    %v498 = vpow.pop %v497
    %507 = vset.pattern.permute.xlu0 0
    %508 = vperm.xlu0 %507, %v484
    %v509 = vpop.permute.xlu0 %508
    %510 = vset.pattern.permute.xlu0 0
    %511 = vperm.xlu0 %510, %v486
    %v512 = vpop.permute.xlu0 %511
    %513 = vset.pattern.permute.xlu0 0
    %514 = vperm.xlu0 %513, %v488
    %v515 = vpop.permute.xlu0 %514
    %516 = vset.pattern.permute.xlu0 0
    %517 = vperm.xlu0 %516, %v490
    %v518 = vpop.permute.xlu0 %517
    %519 = vset.pattern.permute.xlu0 0
    %520 = vperm.xlu0 %519, %v492
    %v521 = vpop.permute.xlu0 %520
    %522 = vset.pattern.permute.xlu0 0
    %523 = vperm.xlu0 %522, %v494
    %v524 = vpop.permute.xlu0 %523
    %525 = vset.pattern.permute.xlu0 0
    %526 = vperm.xlu0 %525, %v496
    %v527 = vpop.permute.xlu0 %526
    %528 = vset.pattern.permute.xlu0 0
    %529 = vperm.xlu0 %528, %v498
    %v530 = vpop.permute.xlu0 %529
    %v531 = vlaneseq
    %v532 = vshrl.u32 %v531, 7
    %v533 = vsub.s32 %v382, %v532
    %v534 = vrot.slane %v509, %v533
    %v535 = vlaneseq
    %v536 = vshrl.u32 %v535, 7
    %v537 = vsub.s32 %v382, %v536
    %v538 = vrot.slane %v512, %v537
    %v539 = vlaneseq
    %v540 = vshrl.u32 %v539, 7
    %v541 = vsub.s32 %v382, %v540
    %v542 = vrot.slane %v515, %v541
    %v543 = vlaneseq
    %v544 = vshrl.u32 %v543, 7
    %v545 = vsub.s32 %v382, %v544
    %v546 = vrot.slane %v518, %v545
    %v547 = vlaneseq
    %v548 = vshrl.u32 %v547, 7
    %v549 = vsub.s32 %v382, %v548
    %v550 = vrot.slane %v521, %v549
    %v551 = vlaneseq
    %v552 = vshrl.u32 %v551, 7
    %v553 = vsub.s32 %v382, %v552
    %v554 = vrot.slane %v524, %v553
    %v555 = vlaneseq
    %v556 = vshrl.u32 %v555, 7
    %v557 = vsub.s32 %v382, %v556
    %v558 = vrot.slane %v527, %v557
    %v559 = vlaneseq
    %v560 = vshrl.u32 %v559, 7
    %v561 = vsub.s32 %v382, %v560
    %v562 = vrot.slane %v530, %v561
    %v563 = vsel %vm415, %v538, %v534
    %v564 = vsel %vm417, %v542, %v563
    %v565 = vsel %vm419, %v546, %v564
    %v566 = vsel %vm421, %v550, %v565
    %v567 = vsel %vm423, %v554, %v566
    %v568 = vsel %vm425, %v558, %v567
    %v569 = vsel %vm427, %v562, %v568
    %v571 = vsel %vm430, %v569, 0.0
    %572 = vadd.xlane.f32.xlu0 %v571
    %v573 = vpop.xlane.xlu0 %572
    %v575 = vlaneseq
    %v576 = vshrl.u32 %v575, 7
    %v577 = vsub.s32 0, %v576
    %v578 = vrot.slane %v573, %v577
    %v579 = vlaneseq
    %v580 = vshrl.u32 %v579, 7
    %v581 = vsub.s32 1, %v580
    %v582 = vrot.slane %v573, %v581
    %v583 = vlaneseq
    %v584 = vshrl.u32 %v583, 7
    %v585 = vsub.s32 2, %v584
    %v586 = vrot.slane %v573, %v585
    %v587 = vlaneseq
    %v588 = vshrl.u32 %v587, 7
    %v589 = vsub.s32 3, %v588
    %v590 = vrot.slane %v573, %v589
    %v591 = vlaneseq
    %v592 = vshrl.u32 %v591, 7
    %v593 = vsub.s32 4, %v592
    %v594 = vrot.slane %v573, %v593
    %v595 = vlaneseq
    %v596 = vshrl.u32 %v595, 7
    %v597 = vsub.s32 5, %v596
    %v598 = vrot.slane %v573, %v597
    %v599 = vlaneseq
    %v600 = vshrl.u32 %v599, 7
    %v601 = vsub.s32 6, %v600
    %v602 = vrot.slane %v573, %v601
    %v603 = vlaneseq
    %v604 = vshrl.u32 %v603, 7
    %v605 = vsub.s32 7, %v604
    %v606 = vrot.slane %v573, %v605
    %v615 = vrcp.pop %v578
    %v616 = vmul.f32 %v484, %v615
    %v617 = vrcp.pop %v582
    %v618 = vmul.f32 %v486, %v617
    %v619 = vrcp.pop %v586
    %v620 = vmul.f32 %v488, %v619
    %v621 = vrcp.pop %v590
    %v622 = vmul.f32 %v490, %v621
    %v623 = vrcp.pop %v594
    %v624 = vmul.f32 %v492, %v623
    %v625 = vrcp.pop %v598
    %v626 = vmul.f32 %v494, %v625
    %v627 = vrcp.pop %v602
    %v628 = vmul.f32 %v496, %v627
    %v629 = vrcp.pop %v606
    %v630 = vmul.f32 %v498, %v629
    %632 = vset.pattern.permute.xlu0 0
    %633 = vperm.xlu0 %632, %v616
    %v634 = vpop.permute.xlu0 %633
    %637 = vset.pattern.permute.xlu0 0
    %638 = vperm.xlu0 %637, %v618
    %v639 = vpop.permute.xlu0 %638
    %642 = vset.pattern.permute.xlu0 0
    %643 = vperm.xlu0 %642, %v620
    %v644 = vpop.permute.xlu0 %643
    %647 = vset.pattern.permute.xlu0 0
    %648 = vperm.xlu0 %647, %v622
    %v649 = vpop.permute.xlu0 %648
    %652 = vset.pattern.permute.xlu0 0
    %653 = vperm.xlu0 %652, %v624
    %v654 = vpop.permute.xlu0 %653
    %657 = vset.pattern.permute.xlu0 0
    %658 = vperm.xlu0 %657, %v626
    %v659 = vpop.permute.xlu0 %658
    %662 = vset.pattern.permute.xlu0 0
    %663 = vperm.xlu0 %662, %v628
    %v664 = vpop.permute.xlu0 %663
    %667 = vset.pattern.permute.xlu0 0
    %668 = vperm.xlu0 %667, %v630
    %v669 = vpop.permute.xlu0 %668
    %v671 = vmul.f32 %v634, %v149
    %v672 = vmul.f32 %v639, %v150
    %v673 = vmul.f32 %v644, %v151
    %v674 = vmul.f32 %v649, %v152
    %v675 = vmul.f32 %v654, %v153
    %v676 = vmul.f32 %v659, %v154
    %v677 = vmul.f32 %v664, %v155
    %v678 = vmul.f32 %v669, %v156
    %v679 = vrot.slane %v671, 4
    %v680 = vadd.f32 %v671, %v679
    %v681 = vrot.slane %v680, 2
    %v682 = vadd.f32 %v680, %v681
    %v683 = vrot.slane %v682, 1
    %v684 = vadd.f32 %v682, %v683
    %v685 = vrot.slane %v672, 4
    %v686 = vadd.f32 %v672, %v685
    %v687 = vrot.slane %v686, 2
    %v688 = vadd.f32 %v686, %v687
    %v689 = vrot.slane %v688, 1
    %v690 = vadd.f32 %v688, %v689
    %v691 = vrot.slane %v673, 4
    %v692 = vadd.f32 %v673, %v691
    %v693 = vrot.slane %v692, 2
    %v694 = vadd.f32 %v692, %v693
    %v695 = vrot.slane %v694, 1
    %v696 = vadd.f32 %v694, %v695
    %v697 = vrot.slane %v674, 4
    %v698 = vadd.f32 %v674, %v697
    %v699 = vrot.slane %v698, 2
    %v700 = vadd.f32 %v698, %v699
    %v701 = vrot.slane %v700, 1
    %v702 = vadd.f32 %v700, %v701
    %v703 = vrot.slane %v675, 4
    %v704 = vadd.f32 %v675, %v703
    %v705 = vrot.slane %v704, 2
    %v706 = vadd.f32 %v704, %v705
    %v707 = vrot.slane %v706, 1
    %v708 = vadd.f32 %v706, %v707
    %v709 = vrot.slane %v676, 4
    %v710 = vadd.f32 %v676, %v709
    %v711 = vrot.slane %v710, 2
    %v712 = vadd.f32 %v710, %v711
    %v713 = vrot.slane %v712, 1
    %v714 = vadd.f32 %v712, %v713
    %v715 = vrot.slane %v677, 4
    %v716 = vadd.f32 %v677, %v715
    %v717 = vrot.slane %v716, 2
    %v718 = vadd.f32 %v716, %v717
    %v719 = vrot.slane %v718, 1
    %v720 = vadd.f32 %v718, %v719
    %v721 = vrot.slane %v678, 4
    %v722 = vadd.f32 %v678, %v721
    %v723 = vrot.slane %v722, 2
    %v724 = vadd.f32 %v722, %v723
    %v725 = vrot.slane %v724, 1
    %v726 = vadd.f32 %v724, %v725
    %727 = vst [vmem:[#allocation2] sm:$0xff] %v147
    %v736 = vsel %vm415, %v690, %v684
    %v737 = vsel %vm417, %v696, %v736
    %v738 = vsel %vm419, %v702, %v737
    %v739 = vsel %vm421, %v708, %v738
    %v740 = vsel %vm423, %v714, %v739
    %v741 = vsel %vm425, %v720, %v740
    %v742 = vsel %vm427, %v726, %v741
    %744 = vst [vmem:[#allocation2 + $0x8] sm:$0xff] %v742
    %v745 = vld [vmem:[#allocation2] sm:$0xff]
    %v746 = vld [vmem:[#allocation2 + $0x8] sm:$0xff]
    %v747 = vld [vmem:[#allocation13] sm:$0xff]
    %v748 = vld [vmem:[#allocation13 + $0x8] sm:$0xff]
    %v749 = vld [vmem:[#allocation13 + $0x10] sm:$0xff]
    %v750 = vld [vmem:[#allocation13 + $0x18] sm:$0xff]
    %v751 = vld [vmem:[#allocation13 + $0x20] sm:$0xff]
    %v752 = vld [vmem:[#allocation13 + $0x28] sm:$0xff]
    %v753 = vld [vmem:[#allocation13 + $0x30] sm:$0xff]
    %v754 = vld [vmem:[#allocation13 + $0x38] sm:$0xff]
    %v755 = vld [vmem:[#allocation13 + $0x40] sm:$0xff]
    %v756 = vld [vmem:[#allocation13 + $0x48] sm:$0xff]
    %v757 = vld [vmem:[#allocation13 + $0x50] sm:$0xff]
    %v758 = vld [vmem:[#allocation13 + $0x58] sm:$0xff]
    %v759 = vld [vmem:[#allocation13 + $0x60] sm:$0xff]
    %v760 = vld [vmem:[#allocation13 + $0x68] sm:$0xff]
    %v761 = vld [vmem:[#allocation13 + $0x70] sm:$0xff]
    %v762 = vld [vmem:[#allocation13 + $0x78] sm:$0xff]
    %v763 = vld [vmem:[#allocation13 + $0x80] sm:$0xff]
    %v764 = vld [vmem:[#allocation13 + $0x88] sm:$0xff]
    %v765 = vld [vmem:[#allocation13 + $0x90] sm:$0xff]
    %v766 = vld [vmem:[#allocation13 + $0x98] sm:$0xff]
    %v767 = vld [vmem:[#allocation13 + $0xa0] sm:$0xff]
    %v768 = vld [vmem:[#allocation13 + $0xa8] sm:$0xff]
    %v769 = vld [vmem:[#allocation13 + $0xb0] sm:$0xff]
    %v770 = vld [vmem:[#allocation13 + $0xb8] sm:$0xff]
    %v771 = vld [vmem:[#allocation13 + $0xc0] sm:$0xff]
    %v772 = vld [vmem:[#allocation13 + $0xc8] sm:$0xff]
    %v773 = vld [vmem:[#allocation13 + $0xd0] sm:$0xff]
    %v774 = vld [vmem:[#allocation13 + $0xd8] sm:$0xff]
    %v775 = vld [vmem:[#allocation13 + $0xe0] sm:$0xff]
    %v776 = vld [vmem:[#allocation13 + $0xe8] sm:$0xff]
    %v777 = vld [vmem:[#allocation13 + $0xf0] sm:$0xff]
    %v778 = vld [vmem:[#allocation13 + $0xf8] sm:$0xff]
    %v779 = vld [vmem:[#allocation13 + $0x100] sm:$0xff]
    %v780 = vld [vmem:[#allocation13 + $0x108] sm:$0xff]
    %v781 = vld [vmem:[#allocation13 + $0x110] sm:$0xff]
    %v782 = vld [vmem:[#allocation13 + $0x118] sm:$0xff]
    %v783 = vld [vmem:[#allocation13 + $0x120] sm:$0xff]
    %v784 = vld [vmem:[#allocation13 + $0x128] sm:$0xff]
    %v785 = vld [vmem:[#allocation13 + $0x130] sm:$0xff]
    %v786 = vld [vmem:[#allocation13 + $0x138] sm:$0xff]
    %v787 = vld [vmem:[#allocation13 + $0x140] sm:$0xff]
    %v788 = vld [vmem:[#allocation13 + $0x148] sm:$0xff]
    %v789 = vld [vmem:[#allocation13 + $0x150] sm:$0xff]
    %v790 = vld [vmem:[#allocation13 + $0x158] sm:$0xff]
    %v791 = vld [vmem:[#allocation13 + $0x160] sm:$0xff]
    %v792 = vld [vmem:[#allocation13 + $0x168] sm:$0xff]
    %v793 = vld [vmem:[#allocation13 + $0x170] sm:$0xff]
    %v794 = vld [vmem:[#allocation13 + $0x178] sm:$0xff]
    %v795 = vld [vmem:[#allocation13 + $0x180] sm:$0xff]
    %v796 = vld [vmem:[#allocation13 + $0x188] sm:$0xff]
    %v797 = vld [vmem:[#allocation13 + $0x190] sm:$0xff]
    %v798 = vld [vmem:[#allocation13 + $0x198] sm:$0xff]
    %v799 = vld [vmem:[#allocation13 + $0x1a0] sm:$0xff]
    %v800 = vld [vmem:[#allocation13 + $0x1a8] sm:$0xff]
    %v801 = vld [vmem:[#allocation13 + $0x1b0] sm:$0xff]
    %v802 = vld [vmem:[#allocation13 + $0x1b8] sm:$0xff]
    %v803 = vld [vmem:[#allocation13 + $0x1c0] sm:$0xff]
    %v804 = vld [vmem:[#allocation13 + $0x1c8] sm:$0xff]
    %v805 = vld [vmem:[#allocation13 + $0x1d0] sm:$0xff]
    %v806 = vld [vmem:[#allocation13 + $0x1d8] sm:$0xff]
    %v807 = vld [vmem:[#allocation13 + $0x1e0] sm:$0xff]
    %v808 = vld [vmem:[#allocation13 + $0x1e8] sm:$0xff]
    %v809 = vld [vmem:[#allocation13 + $0x1f0] sm:$0xff]
    %v810 = vld [vmem:[#allocation13 + $0x1f8] sm:$0xff]
    %v811 = vld [vmem:[#allocation13 + $0x200] sm:$0xff]
    %v812 = vld [vmem:[#allocation13 + $0x208] sm:$0xff]
    %v813 = vld [vmem:[#allocation13 + $0x210] sm:$0xff]
    %v814 = vld [vmem:[#allocation13 + $0x218] sm:$0xff]
    %v815 = vld [vmem:[#allocation13 + $0x220] sm:$0xff]
    %v816 = vld [vmem:[#allocation13 + $0x228] sm:$0xff]
    %v817 = vld [vmem:[#allocation13 + $0x230] sm:$0xff]
    %v818 = vld [vmem:[#allocation13 + $0x238] sm:$0xff]
    %v819 = vld [vmem:[#allocation13 + $0x240] sm:$0xff]
    %v820 = vld [vmem:[#allocation13 + $0x248] sm:$0xff]
    %v821 = vld [vmem:[#allocation13 + $0x250] sm:$0xff]
    %v822 = vld [vmem:[#allocation13 + $0x258] sm:$0xff]
    %v823 = vld [vmem:[#allocation13 + $0x260] sm:$0xff]
    %v824 = vld [vmem:[#allocation13 + $0x268] sm:$0xff]
    %v825 = vld [vmem:[#allocation13 + $0x270] sm:$0xff]
    %v826 = vld [vmem:[#allocation13 + $0x278] sm:$0xff]
    %v827 = vld [vmem:[#allocation13 + $0x280] sm:$0xff]
    %v828 = vld [vmem:[#allocation13 + $0x288] sm:$0xff]
    %v829 = vld [vmem:[#allocation13 + $0x290] sm:$0xff]
    %v830 = vld [vmem:[#allocation13 + $0x298] sm:$0xff]
    %v831 = vld [vmem:[#allocation13 + $0x2a0] sm:$0xff]
    %v832 = vld [vmem:[#allocation13 + $0x2a8] sm:$0xff]
    %v833 = vld [vmem:[#allocation13 + $0x2b0] sm:$0xff]
    %v834 = vld [vmem:[#allocation13 + $0x2b8] sm:$0xff]
    %v835 = vld [vmem:[#allocation13 + $0x2c0] sm:$0xff]
    %v836 = vld [vmem:[#allocation13 + $0x2c8] sm:$0xff]
    %v837 = vld [vmem:[#allocation13 + $0x2d0] sm:$0xff]
    %v838 = vld [vmem:[#allocation13 + $0x2d8] sm:$0xff]
    %v839 = vld [vmem:[#allocation13 + $0x2e0] sm:$0xff]
    %v840 = vld [vmem:[#allocation13 + $0x2e8] sm:$0xff]
    %v841 = vld [vmem:[#allocation13 + $0x2f0] sm:$0xff]
    %v842 = vld [vmem:[#allocation13 + $0x2f8] sm:$0xff]
    %v843 = vld [vmem:[%s6] sm:$0x7]
    %v845 = vlaneseq
    %v846 = vshrl.u32 %v845, 7
    %v847 = vsub.s32 0, %v846
    %v848 = vrot.slane %v843, %v847
    %v849 = vlaneseq
    %v850 = vshrl.u32 %v849, 7
    %v851 = vsub.s32 1, %v850
    %v852 = vrot.slane %v843, %v851
    %v853 = vlaneseq
    %v854 = vshrl.u32 %v853, 7
    %v855 = vsub.s32 2, %v854
    %v856 = vrot.slane %v843, %v855
    %860 = vmatprep.subr.mxu0 %v748
    %861 = vmatpush1.msra.mxu0 %v747
    %862 = vmatprep.subr.mxu0 %v751
    %863 = vmatpush1.msra.mxu0 %v750
    %864 = vmatprep.subr.mxu0 %v754
    %865 = vmatpush1.msra.mxu0 %v753
    %866 = vmatprep.subr.mxu0 %v757
    %867 = vmatpush1.msra.mxu0 %v756
    %868 = vmatprep.subr.mxu0 %v760
    %869 = vmatpush1.msra.mxu0 %v759
    %870 = vmatprep.subr.mxu0 %v763
    %871 = vmatpush1.msra.mxu0 %v762
    %872 = vmatprep.subr.mxu0 %v766
    %873 = vmatpush1.msra.mxu0 %v765
    %874 = vmatprep.subr.mxu0 %v769
    %875 = vmatpush1.msra.mxu0 %v768
    %876 = vmatprep.subr.mxu0 %v772
    %877 = vmatpush1.msra.mxu0 %v771
    %878 = vmatprep.subr.mxu0 %v775
    %879 = vmatpush1.msra.mxu0 %v774
    %880 = vmatprep.subr.mxu0 %v778
    %881 = vmatpush1.msra.mxu0 %v777
    %882 = vmatprep.subr.mxu0 %v781
    %883 = vmatpush1.msra.mxu0 %v780
    %884 = vmatprep.subr.mxu0 %v784
    %885 = vmatpush1.msra.mxu0 %v783
    %886 = vmatprep.subr.mxu0 %v787
    %887 = vmatpush1.msra.mxu0 %v786
    %888 = vmatprep.subr.mxu0 %v790
    %889 = vmatpush1.msra.mxu0 %v789
    %890 = vmatprep.subr.mxu0 %v793
    %891 = vmatpush1.msra.mxu0 %v792
    %892 = vmatprep.subr.mxu0 %v796
    %893 = vmatpush1.msra.mxu0 %v795
    %894 = vmatprep.subr.mxu0 %v799
    %895 = vmatpush1.msra.mxu0 %v798
    %896 = vmatprep.subr.mxu0 %v802
    %897 = vmatpush1.msra.mxu0 %v801
    %898 = vmatprep.subr.mxu0 %v805
    %899 = vmatpush1.msra.mxu0 %v804
    %900 = vmatprep.subr.mxu0 %v808
    %901 = vmatpush1.msra.mxu0 %v807
    %902 = vmatprep.subr.mxu0 %v811
    %903 = vmatpush1.msra.mxu0 %v810
    %904 = vmatprep.subr.mxu0 %v814
    %905 = vmatpush1.msra.mxu0 %v813
    %906 = vmatprep.subr.mxu0 %v817
    %907 = vmatpush1.msra.mxu0 %v816
    %908 = vmatprep.subr.mxu0 %v820
    %909 = vmatpush1.msra.mxu0 %v819
    %910 = vmatprep.subr.mxu0 %v823
    %911 = vmatpush1.msra.mxu0 %v822
    %912 = vmatprep.subr.mxu0 %v826
    %913 = vmatpush1.msra.mxu0 %v825
    %914 = vmatprep.subr.mxu0 %v829
    %915 = vmatpush1.msra.mxu0 %v828
    %916 = vmatprep.subr.mxu0 %v832
    %917 = vmatpush1.msra.mxu0 %v831
    %918 = vmatprep.subr.mxu0 %v835
    %919 = vmatpush1.msra.mxu0 %v834
    %920 = vmatprep.subr.mxu0 %v838
    %921 = vmatpush1.msra.mxu0 %v837
    %922 = vmatprep.subr.mxu0 %v841
    %923 = vmatpush1.msra.mxu0 %v840
    %924 = vmatprep.mubr.f32.mxu0 %v746
    %925 = vmatmul.mubr.f32.gmra.mrb[0].mxu0 %v745
    %v926 = vpop.f32.mrb[0].mxu0
    %v927 = vadd.f32 %v848, %v926
    %v928 = vpop.f32.mrb[0].mxu0
    %v929 = vadd.f32 %v852, %v928
    %930 = vdwg.mxu0
    %931 = vmatprep.subr.mxu0 0.0
    %932 = vmatpush1.msra.mxu0 %v749
    %933 = vmatprep.subr.mxu0 0.0
    %934 = vmatpush1.msra.mxu0 %v752
    %935 = vmatprep.subr.mxu0 0.0
    %936 = vmatpush1.msra.mxu0 %v755
    %937 = vmatprep.subr.mxu0 0.0
    %938 = vmatpush1.msra.mxu0 %v758
    %939 = vmatprep.subr.mxu0 0.0
    %940 = vmatpush1.msra.mxu0 %v761
    %941 = vmatprep.subr.mxu0 0.0
    %942 = vmatpush1.msra.mxu0 %v764
    %943 = vmatprep.subr.mxu0 0.0
    %944 = vmatpush1.msra.mxu0 %v767
    %945 = vmatprep.subr.mxu0 0.0
    %946 = vmatpush1.msra.mxu0 %v770
    %947 = vmatprep.subr.mxu0 0.0
    %948 = vmatpush1.msra.mxu0 %v773
    %949 = vmatprep.subr.mxu0 0.0
    %950 = vmatpush1.msra.mxu0 %v776
    %951 = vmatprep.subr.mxu0 0.0
    %952 = vmatpush1.msra.mxu0 %v779
    %953 = vmatprep.subr.mxu0 0.0
    %954 = vmatpush1.msra.mxu0 %v782
    %955 = vmatprep.subr.mxu0 0.0
    %956 = vmatpush1.msra.mxu0 %v785
    %957 = vmatprep.subr.mxu0 0.0
    %958 = vmatpush1.msra.mxu0 %v788
    %959 = vmatprep.subr.mxu0 0.0
    %960 = vmatpush1.msra.mxu0 %v791
    %961 = vmatprep.subr.mxu0 0.0
    %962 = vmatpush1.msra.mxu0 %v794
    %963 = vmatprep.subr.mxu0 0.0
    %964 = vmatpush1.msra.mxu0 %v797
    %965 = vmatprep.subr.mxu0 0.0
    %966 = vmatpush1.msra.mxu0 %v800
    %967 = vmatprep.subr.mxu0 0.0
    %968 = vmatpush1.msra.mxu0 %v803
    %969 = vmatprep.subr.mxu0 0.0
    %970 = vmatpush1.msra.mxu0 %v806
    %971 = vmatprep.subr.mxu0 0.0
    %972 = vmatpush1.msra.mxu0 %v809
    %973 = vmatprep.subr.mxu0 0.0
    %974 = vmatpush1.msra.mxu0 %v812
    %975 = vmatprep.subr.mxu0 0.0
    %976 = vmatpush1.msra.mxu0 %v815
    %977 = vmatprep.subr.mxu0 0.0
    %978 = vmatpush1.msra.mxu0 %v818
    %979 = vmatprep.subr.mxu0 0.0
    %980 = vmatpush1.msra.mxu0 %v821
    %981 = vmatprep.subr.mxu0 0.0
    %982 = vmatpush1.msra.mxu0 %v824
    %983 = vmatprep.subr.mxu0 0.0
    %984 = vmatpush1.msra.mxu0 %v827
    %985 = vmatprep.subr.mxu0 0.0
    %986 = vmatpush1.msra.mxu0 %v830
    %987 = vmatprep.subr.mxu0 0.0
    %988 = vmatpush1.msra.mxu0 %v833
    %989 = vmatprep.subr.mxu0 0.0
    %990 = vmatpush1.msra.mxu0 %v836
    %991 = vmatprep.subr.mxu0 0.0
    %992 = vmatpush1.msra.mxu0 %v839
    %993 = vmatprep.subr.mxu0 0.0
    %994 = vmatpush1.msra.mxu0 %v842
    %995 = vmatprep.mubr.f32.mxu0 %v746
    %996 = vmatmul.mubr.f32.gmra.mrb[0].mxu0 %v745
    %v997 = vpop.f32.mrb[0].mxu0
    %v998 = vadd.f32 %v856, %v997
    %v999 = vpop.f32.mrb[0].mxu0
    %1000 = vdwg.mxu0
    %v1001 = vld [vmem:[#allocation15] sm:$0xff]
    %v1002 = vld [vmem:[#allocation15 + $0x8] sm:$0xff]
    %v1003 = vld [vmem:[#allocation15 + $0x10] sm:$0xff]
    %v1004 = vld [vmem:[#allocation15 + $0x18] sm:$0xff]
    %v1005 = vld [vmem:[#allocation15 + $0x20] sm:$0xff]
    %v1006 = vld [vmem:[#allocation15 + $0x28] sm:$0xff]
    %v1007 = vld [vmem:[#allocation15 + $0x30] sm:$0xff]
    %v1008 = vld [vmem:[#allocation15 + $0x38] sm:$0xff]
    %v1009 = vld [vmem:[#allocation15 + $0x40] sm:$0xff]
    %v1010 = vld [vmem:[#allocation15 + $0x48] sm:$0xff]
    %v1011 = vld [vmem:[#allocation15 + $0x50] sm:$0xff]
    %v1012 = vld [vmem:[#allocation15 + $0x58] sm:$0xff]
    %v1013 = vld [vmem:[#allocation15 + $0x60] sm:$0xff]
    %v1014 = vld [vmem:[#allocation15 + $0x68] sm:$0xff]
    %v1015 = vld [vmem:[#allocation15 + $0x70] sm:$0xff]
    %v1016 = vld [vmem:[#allocation15 + $0x78] sm:$0xff]
    %v1017 = vld [vmem:[#allocation15 + $0x80] sm:$0xff]
    %v1018 = vld [vmem:[#allocation15 + $0x88] sm:$0xff]
    %v1019 = vld [vmem:[#allocation15 + $0x90] sm:$0xff]
    %v1020 = vld [vmem:[#allocation15 + $0x98] sm:$0xff]
    %v1021 = vld [vmem:[#allocation15 + $0xa0] sm:$0xff]
    %v1022 = vld [vmem:[#allocation15 + $0xa8] sm:$0xff]
    %v1023 = vld [vmem:[#allocation15 + $0xb0] sm:$0xff]
    %v1024 = vld [vmem:[#allocation15 + $0xb8] sm:$0xff]
    %v1025 = vld [vmem:[#allocation15 + $0xc0] sm:$0xff]
    %v1026 = vld [vmem:[#allocation15 + $0xc8] sm:$0xff]
    %v1027 = vld [vmem:[#allocation15 + $0xd0] sm:$0xff]
    %v1028 = vld [vmem:[#allocation15 + $0xd8] sm:$0xff]
    %v1029 = vld [vmem:[#allocation15 + $0xe0] sm:$0xff]
    %v1030 = vld [vmem:[#allocation15 + $0xe8] sm:$0xff]
    %v1031 = vld [vmem:[#allocation15 + $0xf0] sm:$0xff]
    %v1032 = vld [vmem:[#allocation15 + $0xf8] sm:$0xff]
    %v1033 = vld [vmem:[#allocation15 + $0x100] sm:$0xff]
    %v1034 = vld [vmem:[#allocation15 + $0x108] sm:$0xff]
    %v1035 = vld [vmem:[#allocation15 + $0x110] sm:$0xff]
    %v1036 = vld [vmem:[#allocation15 + $0x118] sm:$0xff]
    %v1037 = vld [vmem:[#allocation15 + $0x120] sm:$0xff]
    %v1038 = vld [vmem:[#allocation15 + $0x128] sm:$0xff]
    %v1039 = vld [vmem:[#allocation15 + $0x130] sm:$0xff]
    %v1040 = vld [vmem:[#allocation15 + $0x138] sm:$0xff]
    %v1041 = vld [vmem:[#allocation15 + $0x140] sm:$0xff]
    %v1042 = vld [vmem:[#allocation15 + $0x148] sm:$0xff]
    %v1043 = vld [vmem:[#allocation15 + $0x150] sm:$0xff]
    %v1044 = vld [vmem:[#allocation15 + $0x158] sm:$0xff]
    %v1045 = vld [vmem:[#allocation15 + $0x160] sm:$0xff]
    %v1046 = vld [vmem:[#allocation15 + $0x168] sm:$0xff]
    %v1047 = vld [vmem:[#allocation15 + $0x170] sm:$0xff]
    %v1048 = vld [vmem:[#allocation15 + $0x178] sm:$0xff]
    %v1049 = vld [vmem:[%s8] sm:$0x7]
    %v1051 = vlaneseq
    %v1052 = vshrl.u32 %v1051, 7
    %v1053 = vsub.s32 0, %v1052
    %v1054 = vrot.slane %v1049, %v1053
    %v1055 = vlaneseq
    %v1056 = vshrl.u32 %v1055, 7
    %v1057 = vsub.s32 1, %v1056
    %v1058 = vrot.slane %v1049, %v1057
    %v1059 = vlaneseq
    %v1060 = vshrl.u32 %v1059, 7
    %v1061 = vsub.s32 2, %v1060
    %v1062 = vrot.slane %v1049, %v1061
    %1066 = vmatprep.subr.mxu0 %v1002
    %1067 = vmatpush1.msra.mxu0 %v1001
    %1068 = vmatprep.subr.mxu0 %v1005
    %1069 = vmatpush1.msra.mxu0 %v1004
    %1070 = vmatprep.subr.mxu0 %v1008
    %1071 = vmatpush1.msra.mxu0 %v1007
    %1072 = vmatprep.subr.mxu0 %v1011
    %1073 = vmatpush1.msra.mxu0 %v1010
    %1074 = vmatprep.subr.mxu0 %v1014
    %1075 = vmatpush1.msra.mxu0 %v1013
    %1076 = vmatprep.subr.mxu0 %v1017
    %1077 = vmatpush1.msra.mxu0 %v1016
    %1078 = vmatprep.subr.mxu0 %v1020
    %1079 = vmatpush1.msra.mxu0 %v1019
    %1080 = vmatprep.subr.mxu0 %v1023
    %1081 = vmatpush1.msra.mxu0 %v1022
    %1082 = vmatprep.subr.mxu0 %v1026
    %1083 = vmatpush1.msra.mxu0 %v1025
    %1084 = vmatprep.subr.mxu0 %v1029
    %1085 = vmatpush1.msra.mxu0 %v1028
    %1086 = vmatprep.subr.mxu0 %v1032
    %1087 = vmatpush1.msra.mxu0 %v1031
    %1088 = vmatprep.subr.mxu0 %v1035
    %1089 = vmatpush1.msra.mxu0 %v1034
    %1090 = vmatprep.subr.mxu0 %v1038
    %1091 = vmatpush1.msra.mxu0 %v1037
    %1092 = vmatprep.subr.mxu0 %v1041
    %1093 = vmatpush1.msra.mxu0 %v1040
    %1094 = vmatprep.subr.mxu0 %v1044
    %1095 = vmatpush1.msra.mxu0 %v1043
    %1096 = vmatprep.subr.mxu0 %v1047
    %1097 = vmatpush1.msra.mxu0 %v1046
    %1098 = vmatprep.subr.mxu0 0.0
    %1099 = vmatpush1.msra.mxu0 0.0
    %1100 = vmatprep.subr.mxu0 0.0
    %1101 = vmatpush1.msra.mxu0 0.0
    %1102 = vmatprep.subr.mxu0 0.0
    %1103 = vmatpush1.msra.mxu0 0.0
    %1104 = vmatprep.subr.mxu0 0.0
    %1105 = vmatpush1.msra.mxu0 0.0
    %1106 = vmatprep.subr.mxu0 0.0
    %1107 = vmatpush1.msra.mxu0 0.0
    %1108 = vmatprep.subr.mxu0 0.0
    %1109 = vmatpush1.msra.mxu0 0.0
    %1110 = vmatprep.subr.mxu0 0.0
    %1111 = vmatpush1.msra.mxu0 0.0
    %1112 = vmatprep.subr.mxu0 0.0
    %1113 = vmatpush1.msra.mxu0 0.0
    %1114 = vmatprep.subr.mxu0 0.0
    %1115 = vmatpush1.msra.mxu0 0.0
    %1116 = vmatprep.subr.mxu0 0.0
    %1117 = vmatpush1.msra.mxu0 0.0
    %1118 = vmatprep.subr.mxu0 0.0
    %1119 = vmatpush1.msra.mxu0 0.0
    %1120 = vmatprep.subr.mxu0 0.0
    %1121 = vmatpush1.msra.mxu0 0.0
    %1122 = vmatprep.subr.mxu0 0.0
    %1123 = vmatpush1.msra.mxu0 0.0
    %1124 = vmatprep.subr.mxu0 0.0
    %1125 = vmatpush1.msra.mxu0 0.0
    %1126 = vmatprep.subr.mxu0 0.0
    %1127 = vmatpush1.msra.mxu0 0.0
    %1128 = vmatprep.subr.mxu0 0.0
    %1129 = vmatpush1.msra.mxu0 0.0
    %1130 = vmatprep.mubr.f32.mxu0 0.0
    %1131 = vmatmul.mubr.f32.gmra.mrb[0].mxu0 %v148
    %v1132 = vpop.f32.mrb[0].mxu0
    %v1133 = vadd.f32 %v1054, %v1132
    %v1134 = vpop.f32.mrb[0].mxu0
    %v1135 = vadd.f32 %v1058, %v1134
    %1136 = vdwg.mxu0
    %1137 = vmatprep.subr.mxu0 0.0
    %1138 = vmatpush1.msra.mxu0 %v1003
    %1139 = vmatprep.subr.mxu0 0.0
    %1140 = vmatpush1.msra.mxu0 %v1006
    %1141 = vmatprep.subr.mxu0 0.0
    %1142 = vmatpush1.msra.mxu0 %v1009
    %1143 = vmatprep.subr.mxu0 0.0
    %1144 = vmatpush1.msra.mxu0 %v1012
    %1145 = vmatprep.subr.mxu0 0.0
    %1146 = vmatpush1.msra.mxu0 %v1015
    %1147 = vmatprep.subr.mxu0 0.0
    %1148 = vmatpush1.msra.mxu0 %v1018
    %1149 = vmatprep.subr.mxu0 0.0
    %1150 = vmatpush1.msra.mxu0 %v1021
    %1151 = vmatprep.subr.mxu0 0.0
    %1152 = vmatpush1.msra.mxu0 %v1024
    %1153 = vmatprep.subr.mxu0 0.0
    %1154 = vmatpush1.msra.mxu0 %v1027
    %1155 = vmatprep.subr.mxu0 0.0
    %1156 = vmatpush1.msra.mxu0 %v1030
    %1157 = vmatprep.subr.mxu0 0.0
    %1158 = vmatpush1.msra.mxu0 %v1033
    %1159 = vmatprep.subr.mxu0 0.0
    %1160 = vmatpush1.msra.mxu0 %v1036
    %1161 = vmatprep.subr.mxu0 0.0
    %1162 = vmatpush1.msra.mxu0 %v1039
    %1163 = vmatprep.subr.mxu0 0.0
    %1164 = vmatpush1.msra.mxu0 %v1042
    %1165 = vmatprep.subr.mxu0 0.0
    %1166 = vmatpush1.msra.mxu0 %v1045
    %1167 = vmatprep.subr.mxu0 0.0
    %1168 = vmatpush1.msra.mxu0 %v1048
    %1169 = vmatprep.subr.mxu0 0.0
    %1170 = vmatpush1.msra.mxu0 0.0
    %1171 = vmatprep.subr.mxu0 0.0
    %1172 = vmatpush1.msra.mxu0 0.0
    %1173 = vmatprep.subr.mxu0 0.0
    %1174 = vmatpush1.msra.mxu0 0.0
    %1175 = vmatprep.subr.mxu0 0.0
    %1176 = vmatpush1.msra.mxu0 0.0
    %1177 = vmatprep.subr.mxu0 0.0
    %1178 = vmatpush1.msra.mxu0 0.0
    %1179 = vmatprep.subr.mxu0 0.0
    %1180 = vmatpush1.msra.mxu0 0.0
    %1181 = vmatprep.subr.mxu0 0.0
    %1182 = vmatpush1.msra.mxu0 0.0
    %1183 = vmatprep.subr.mxu0 0.0
    %1184 = vmatpush1.msra.mxu0 0.0
    %1185 = vmatprep.subr.mxu0 0.0
    %1186 = vmatpush1.msra.mxu0 0.0
    %1187 = vmatprep.subr.mxu0 0.0
    %1188 = vmatpush1.msra.mxu0 0.0
    %1189 = vmatprep.subr.mxu0 0.0
    %1190 = vmatpush1.msra.mxu0 0.0
    %1191 = vmatprep.subr.mxu0 0.0
    %1192 = vmatpush1.msra.mxu0 0.0
    %1193 = vmatprep.subr.mxu0 0.0
    %1194 = vmatpush1.msra.mxu0 0.0
    %1195 = vmatprep.subr.mxu0 0.0
    %1196 = vmatpush1.msra.mxu0 0.0
    %1197 = vmatprep.subr.mxu0 0.0
    %1198 = vmatpush1.msra.mxu0 0.0
    %1199 = vmatprep.subr.mxu0 0.0
    %1200 = vmatpush1.msra.mxu0 0.0
    %1201 = vmatprep.mubr.f32.mxu0 0.0
    %1202 = vmatmul.mubr.f32.gmra.mrb[0].mxu0 %v148
    %v1203 = vpop.f32.mrb[0].mxu0
    %v1204 = vadd.f32 %v1062, %v1203
    %v1205 = vpop.f32.mrb[0].mxu0
    %1206 = vdwg.mxu0
    %v1207 = vadd.f32 %v927, %v1133
    %v1208 = vxor.u32 %v1207, 2147483648
    %v1209 = vmul.f32 %v1208, 1.442695
    %v1210 = vpow.pop %v1209
    %v1211 = vadd.f32 %v1210, 1.0
    %v1212 = vrcp.pop %v1211
    %v1213 = vmul.f32 1.0, %v1212
    %v1214 = vadd.f32 %v929, %v1135
    %v1215 = vxor.u32 %v1214, 2147483648
    %v1216 = vmul.f32 %v1215, 1.442695
    %v1217 = vpow.pop %v1216
    %v1218 = vadd.f32 %v1217, 1.0
    %v1219 = vrcp.pop %v1218
    %v1220 = vmul.f32 1.0, %v1219
    %v1221 = vmul.f32 %v1213, %v1204
    %v1222 = vadd.f32 %v998, %v1221
    %v1223 = vtanh.pop %v1222
    %v1224 = vsub.f32 1.0, %v1220
    %v1225 = vmul.f32 %v1224, %v1223
    %v1226 = vmul.f32 %v1220, %v148
    %v1227 = vadd.f32 %v1225, %v1226
    %1228 = vst [vmem:[#allocation3] sm:$0xff] %v1227
    %1229 = vst [vmem:[#allocation3 + $0x8] sm:$0xff] %v742
    %1230 = vst [vmem:[#allocation3 + $0x10] sm:$0xff] %v147
    %v1231 = vld [vmem:[#allocation3] sm:$0xff]
    %v1232 = vld [vmem:[#allocation3 + $0x8] sm:$0xff]
    %v1233 = vld [vmem:[#allocation3 + $0x10] sm:$0xff]
    %v1234 = vld [vmem:[#allocation16] sm:$0xff]
    %v1235 = vld [vmem:[#allocation16 + $0x8] sm:$0xff]
    %v1236 = vld [vmem:[#allocation16 + $0x10] sm:$0xff]
    %v1237 = vld [vmem:[#allocation16 + $0x18] sm:$0xff]
    %v1238 = vld [vmem:[#allocation16 + $0x20] sm:$0xff]
    %v1239 = vld [vmem:[#allocation16 + $0x28] sm:$0xff]
    %v1240 = vld [vmem:[#allocation16 + $0x30] sm:$0xff]
    %v1241 = vld [vmem:[#allocation16 + $0x38] sm:$0xff]
    %v1242 = vld [vmem:[#allocation16 + $0x40] sm:$0xff]
    %v1243 = vld [vmem:[#allocation16 + $0x48] sm:$0xff]
    %v1244 = vld [vmem:[#allocation16 + $0x50] sm:$0xff]
    %v1245 = vld [vmem:[#allocation16 + $0x58] sm:$0xff]
    %v1246 = vld [vmem:[#allocation16 + $0x60] sm:$0xff]
    %v1247 = vld [vmem:[#allocation16 + $0x68] sm:$0xff]
    %v1248 = vld [vmem:[#allocation16 + $0x70] sm:$0xff]
    %v1249 = vld [vmem:[#allocation16 + $0x78] sm:$0xff]
    %v1250 = vld [vmem:[#allocation16 + $0x80] sm:$0xff]
    %v1251 = vld [vmem:[#allocation16 + $0x88] sm:$0xff]
    %v1252 = vld [vmem:[#allocation16 + $0x90] sm:$0xff]
    %v1253 = vld [vmem:[#allocation16 + $0x98] sm:$0xff]
    %v1254 = vld [vmem:[#allocation16 + $0xa0] sm:$0xff]
    %v1255 = vld [vmem:[#allocation16 + $0xa8] sm:$0xff]
    %v1256 = vld [vmem:[#allocation16 + $0xb0] sm:$0xff]
    %v1257 = vld [vmem:[#allocation16 + $0xb8] sm:$0xff]
    %v1258 = vld [vmem:[#allocation16 + $0xc0] sm:$0xff]
    %v1259 = vld [vmem:[#allocation16 + $0xc8] sm:$0xff]
    %v1260 = vld [vmem:[#allocation16 + $0xd0] sm:$0xff]
    %v1261 = vld [vmem:[#allocation16 + $0xd8] sm:$0xff]
    %v1262 = vld [vmem:[#allocation16 + $0xe0] sm:$0xff]
    %v1263 = vld [vmem:[#allocation16 + $0xe8] sm:$0xff]
    %v1264 = vld [vmem:[#allocation16 + $0xf0] sm:$0xff]
    %v1265 = vld [vmem:[#allocation16 + $0xf8] sm:$0xff]
    %v1266 = vld [vmem:[#allocation16 + $0x100] sm:$0xff]
    %v1267 = vld [vmem:[#allocation16 + $0x108] sm:$0xff]
    %v1268 = vld [vmem:[#allocation16 + $0x110] sm:$0xff]
    %v1269 = vld [vmem:[#allocation16 + $0x118] sm:$0xff]
    %v1270 = vld [vmem:[#allocation16 + $0x120] sm:$0xff]
    %v1271 = vld [vmem:[#allocation16 + $0x128] sm:$0xff]
    %v1272 = vld [vmem:[#allocation16 + $0x130] sm:$0xff]
    %v1273 = vld [vmem:[#allocation16 + $0x138] sm:$0xff]
    %v1274 = vld [vmem:[#allocation16 + $0x140] sm:$0xff]
    %v1275 = vld [vmem:[#allocation16 + $0x148] sm:$0xff]
    %v1276 = vld [vmem:[#allocation16 + $0x150] sm:$0xff]
    %v1277 = vld [vmem:[#allocation16 + $0x158] sm:$0xff]
    %v1278 = vld [vmem:[#allocation16 + $0x160] sm:$0xff]
    %v1279 = vld [vmem:[#allocation16 + $0x168] sm:$0xff]
    %v1280 = vld [vmem:[#allocation16 + $0x170] sm:$0xff]
    %v1281 = vld [vmem:[#allocation16 + $0x178] sm:$0xff]
    %v1282 = vld [vmem:[%s10] sm:$0x1]
    %v1284 = vlaneseq
    %v1285 = vshrl.u32 %v1284, 7
    %v1286 = vsub.s32 0, %v1285
    %v1287 = vrot.slane %v1282, %v1286
    %1289 = vmatprep.subr.mxu0 0.0
    %1290 = vmatpush1.msra.mxu0 %v1234
    %1291 = vmatprep.subr.mxu0 0.0
    %1292 = vmatpush1.msra.mxu0 %v1235
    %1293 = vmatprep.subr.mxu0 0.0
    %1294 = vmatpush1.msra.mxu0 %v1236
    %1295 = vmatprep.subr.mxu0 0.0
    %1296 = vmatpush1.msra.mxu0 %v1237
    %1297 = vmatprep.subr.mxu0 0.0
    %1298 = vmatpush1.msra.mxu0 %v1238
    %1299 = vmatprep.subr.mxu0 0.0
    %1300 = vmatpush1.msra.mxu0 %v1239
    %1301 = vmatprep.subr.mxu0 0.0
    %1302 = vmatpush1.msra.mxu0 %v1240
    %1303 = vmatprep.subr.mxu0 0.0
    %1304 = vmatpush1.msra.mxu0 %v1241
    %1305 = vmatprep.subr.mxu0 0.0
    %1306 = vmatpush1.msra.mxu0 %v1242
    %1307 = vmatprep.subr.mxu0 0.0
    %1308 = vmatpush1.msra.mxu0 %v1243
    %1309 = vmatprep.subr.mxu0 0.0
    %1310 = vmatpush1.msra.mxu0 %v1244
    %1311 = vmatprep.subr.mxu0 0.0
    %1312 = vmatpush1.msra.mxu0 %v1245
    %1313 = vmatprep.subr.mxu0 0.0
    %1314 = vmatpush1.msra.mxu0 %v1246
    %1315 = vmatprep.subr.mxu0 0.0
    %1316 = vmatpush1.msra.mxu0 %v1247
    %1317 = vmatprep.subr.mxu0 0.0
    %1318 = vmatpush1.msra.mxu0 %v1248
    %1319 = vmatprep.subr.mxu0 0.0
    %1320 = vmatpush1.msra.mxu0 %v1249
    %1321 = vmatprep.subr.mxu0 0.0
    %1322 = vmatpush1.msra.mxu0 %v1250
    %1323 = vmatprep.subr.mxu0 0.0
    %1324 = vmatpush1.msra.mxu0 %v1251
    %1325 = vmatprep.subr.mxu0 0.0
    %1326 = vmatpush1.msra.mxu0 %v1252
    %1327 = vmatprep.subr.mxu0 0.0
    %1328 = vmatpush1.msra.mxu0 %v1253
    %1329 = vmatprep.subr.mxu0 0.0
    %1330 = vmatpush1.msra.mxu0 %v1254
    %1331 = vmatprep.subr.mxu0 0.0
    %1332 = vmatpush1.msra.mxu0 %v1255
    %1333 = vmatprep.subr.mxu0 0.0
    %1334 = vmatpush1.msra.mxu0 %v1256
    %1335 = vmatprep.subr.mxu0 0.0
    %1336 = vmatpush1.msra.mxu0 %v1257
    %1337 = vmatprep.subr.mxu0 0.0
    %1338 = vmatpush1.msra.mxu0 %v1258
    %1339 = vmatprep.subr.mxu0 0.0
    %1340 = vmatpush1.msra.mxu0 %v1259
    %1341 = vmatprep.subr.mxu0 0.0
    %1342 = vmatpush1.msra.mxu0 %v1260
    %1343 = vmatprep.subr.mxu0 0.0
    %1344 = vmatpush1.msra.mxu0 %v1261
    %1345 = vmatprep.subr.mxu0 0.0
    %1346 = vmatpush1.msra.mxu0 %v1262
    %1347 = vmatprep.subr.mxu0 0.0
    %1348 = vmatpush1.msra.mxu0 %v1263
    %1349 = vmatprep.subr.mxu0 0.0
    %1350 = vmatpush1.msra.mxu0 %v1264
    %1351 = vmatprep.subr.mxu0 0.0
    %1352 = vmatpush1.msra.mxu0 %v1265
    %1353 = vmatprep.mubr.f32.mxu0 %v1232
    %1354 = vmatmul.mubr.f32.gmra.mrb[0].mxu0 %v1231
    %v1355 = vpop.f32.mrb[0].mxu0
    %v1356 = vadd.f32 %v1287, %v1355
    %v1357 = vpop.f32.mrb[0].mxu0
    %1358 = vdwg.mxu0
    %1359 = vmatprep.subr.mxu0 0.0
    %1360 = vmatpush1.msra.mxu0 %v1266
    %1361 = vmatprep.subr.mxu0 0.0
    %1362 = vmatpush1.msra.mxu0 %v1267
    %1363 = vmatprep.subr.mxu0 0.0
    %1364 = vmatpush1.msra.mxu0 %v1268
    %1365 = vmatprep.subr.mxu0 0.0
    %1366 = vmatpush1.msra.mxu0 %v1269
    %1367 = vmatprep.subr.mxu0 0.0
    %1368 = vmatpush1.msra.mxu0 %v1270
    %1369 = vmatprep.subr.mxu0 0.0
    %1370 = vmatpush1.msra.mxu0 %v1271
    %1371 = vmatprep.subr.mxu0 0.0
    %1372 = vmatpush1.msra.mxu0 %v1272
    %1373 = vmatprep.subr.mxu0 0.0
    %1374 = vmatpush1.msra.mxu0 %v1273
    %1375 = vmatprep.subr.mxu0 0.0
    %1376 = vmatpush1.msra.mxu0 %v1274
    %1377 = vmatprep.subr.mxu0 0.0
    %1378 = vmatpush1.msra.mxu0 %v1275
    %1379 = vmatprep.subr.mxu0 0.0
    %1380 = vmatpush1.msra.mxu0 %v1276
    %1381 = vmatprep.subr.mxu0 0.0
    %1382 = vmatpush1.msra.mxu0 %v1277
    %1383 = vmatprep.subr.mxu0 0.0
    %1384 = vmatpush1.msra.mxu0 %v1278
    %1385 = vmatprep.subr.mxu0 0.0
    %1386 = vmatpush1.msra.mxu0 %v1279
    %1387 = vmatprep.subr.mxu0 0.0
    %1388 = vmatpush1.msra.mxu0 %v1280
    %1389 = vmatprep.subr.mxu0 0.0
    %1390 = vmatpush1.msra.mxu0 %v1281
    %1391 = vmatprep.subr.mxu0 0.0
    %1392 = vmatpush1.msra.mxu0 0.0
    %1393 = vmatprep.subr.mxu0 0.0
    %1394 = vmatpush1.msra.mxu0 0.0
    %1395 = vmatprep.subr.mxu0 0.0
    %1396 = vmatpush1.msra.mxu0 0.0
    %1397 = vmatprep.subr.mxu0 0.0
    %1398 = vmatpush1.msra.mxu0 0.0
    %1399 = vmatprep.subr.mxu0 0.0
    %1400 = vmatpush1.msra.mxu0 0.0
    %1401 = vmatprep.subr.mxu0 0.0
    %1402 = vmatpush1.msra.mxu0 0.0
    %1403 = vmatprep.subr.mxu0 0.0
    %1404 = vmatpush1.msra.mxu0 0.0
    %1405 = vmatprep.subr.mxu0 0.0
    %1406 = vmatpush1.msra.mxu0 0.0
    %1407 = vmatprep.subr.mxu0 0.0
    %1408 = vmatpush1.msra.mxu0 0.0
    %1409 = vmatprep.subr.mxu0 0.0
    %1410 = vmatpush1.msra.mxu0 0.0
    %1411 = vmatprep.subr.mxu0 0.0
    %1412 = vmatpush1.msra.mxu0 0.0
    %1413 = vmatprep.subr.mxu0 0.0
    %1414 = vmatpush1.msra.mxu0 0.0
    %1415 = vmatprep.subr.mxu0 0.0
    %1416 = vmatpush1.msra.mxu0 0.0
    %1417 = vmatprep.subr.mxu0 0.0
    %1418 = vmatpush1.msra.mxu0 0.0
    %1419 = vmatprep.subr.mxu0 0.0
    %1420 = vmatpush1.msra.mxu0 0.0
    %1421 = vmatprep.subr.mxu0 0.0
    %1422 = vmatpush1.msra.mxu0 0.0
    %1423 = vmatprep.mubr.f32.mxu0 0.0
    %1424 = vmatmul.mubr.f32.gmra.mrb[0].mxu0 %v1233
    %v1425 = vpop.f32.mrb[0].mxu0
    %v1426 = vadd.f32 %v1356, %v1425
    %v1427 = vpop.f32.mrb[0].mxu0
    %1428 = vdwg.mxu0
    %1429 = vst [vmem:[#allocation18] sm:$0xff] %v1426
    %1430 = vst [vmem:[#allocation19] sm:$0xff] %v1227
    // Predicated region
    $region78: #{tpu_custom_call.1} parent=1 // pred_check
      _
    $region79: #{tpu_custom_call.1} parent=1 // pred_check_branch
      %1432 = sbr.rel (0) target = $region81
    $region80: #{tpu_custom_call.1} parent=1 // pred_region
      %s1434 = ssub.s32 128, 128
      %1435 = vsyncadd [#allocation6], %s1434
      %s1437 = sshll.u32 [#allocation18], 4
      %s1438 = int_to_ptr.vmem [resolvable:$true] %s1437
      %1440 = dma.vmem_to_hbm [thread:$0]  %s1438, 128, %s11, [#allocation6]
    $region81: #{tpu_custom_call.1} parent=1 // pred_fallthru
      _
    // Predicated region
    $region82: #{tpu_custom_call.1} parent=1 // pred_check
      _
    $region83: #{tpu_custom_call.1} parent=1 // pred_check_branch
      %1442 = sbr.rel (0) target = $region85
    $region84: #{tpu_custom_call.1} parent=1 // pred_region
      %s1444 = ssub.s32 128, 128
      %1445 = vsyncadd [#allocation20], %s1444
      %s1447 = sshll.u32 [#allocation19], 4
      %s1448 = int_to_ptr.vmem [resolvable:$true] %s1447
      %1450 = dma.vmem_to_hbm [thread:$0]  %s1448, 128, %s12, [#allocation20]
    $region85: #{tpu_custom_call.1} parent=1 // pred_fallthru
      _
    // Predicated region
    $region86: #{tpu_custom_call.1} parent=1 // pred_check
      _
    $region87: #{tpu_custom_call.1} parent=1 // pred_check_branch
      %1452 = sbr.rel (0) target = $region89
    $region88: #{tpu_custom_call.1} parent=1 // pred_region
      %1453 = dma.done [#allocation6], 128
    $region89: #{tpu_custom_call.1} parent=1 // pred_fallthru
      _
    // Predicated region
    $region90: #{tpu_custom_call.1} parent=1 // pred_check
      _
    $region91: #{tpu_custom_call.1} parent=1 // pred_check_branch
      %1455 = sbr.rel (0) target = $region93
    $region92: #{tpu_custom_call.1} parent=1 // pred_region
      %1456 = dma.done [#allocation20], 128
    $region93: #{tpu_custom_call.1} parent=1 // pred_fallthru
      _
    %1457 = vsyncpa [#allocation5], 1
    %1458 = vsyncpa [#allocation8], 1
    %1459 = vsyncpa [#allocation11], 1
    %1460 = vsyncpa [#allocation14], 1
    %1461 = vsyncpa [#allocation17], 1
    %1462 = vsyncpa [#allocation6], 1
    %1463 = vsyncpa [#allocation20], 1

</llo_original>
